<compile_context>
chip_gen: v7x
topology: tpu7x:2x2x1
jax: 0.10.0
libtpu: 0.0.40
codegen_flags: <defaults>
</compile_context>

<pallas_src>
import numpy as np
import jax
import jax.numpy as jnp
from jax import lax
from jax.experimental import pallas as pl
from jax.experimental.pallas import tpu as pltpu

EPS = 1e-5  # torch.nn.InstanceNorm2d default eps (affine=False, biased variance)

# Tap order matches the weight layout built in the wrapper: t = ky*3 + kx.
_TAPS = tuple((dy, dx) for dy in (-1, 0, 1) for dx in (-1, 0, 1))


def _make_kernel(H, W):
    HW = H * W
    inv_hw = 1.0 / float(HW)

    def kernel(x_ref, w1_ref, w2_ref, mask_ref, o_ref):
        # x_ref   : (bb, C, HW)   activations, lane dim = H*W (lane dense)
        # w*_ref  : (C*9, C, 1)   weights; row = co*9 + (ky*3+kx), sublanes = ci
        # mask_ref: (9, 1, HW)    0/1 zero-padding masks per tap
        # o_ref   : (bb, C, HW)
        bb, C, _ = x_ref.shape

        def conv_instnorm(z, w_ref):
            # z: (C, HW) f32 -> 3x3 conv (zero pad) -> InstanceNorm (no affine/act)
            taps = []
            for t, (dy, dx) in enumerate(_TAPS):
                s = dy * W + dx
                if s == 0:
                    taps.append(z)                              # center tap, mask == 1
                else:
                    shifted = pltpu.roll(z, shift=(-s) % HW, axis=1)  # out[p] = z[p+s]
                    taps.append(shifted * mask_ref[t])          # (C,HW) * (1,HW)
            rows = []
            for co in range(C):
                # contract (tap, ci): per-sublane weight broadcast + sublane reduce
                acc = taps[0] * w_ref[co * 9 + 0]               # (C,HW) * (C,1)
                for t in range(1, 9):
                    acc = acc + taps[t] * w_ref[co * 9 + t]
                y = jnp.sum(acc, axis=0, keepdims=True)         # (1, HW)
                # one-pass InstanceNorm stats (biased variance, eps=1e-5)
                s1 = jnp.sum(y)
                s2 = jnp.sum(y * y)
                mean = s1 * inv_hw
                var = s2 * inv_hw - mean * mean
                rows.append((y - mean) * lax.rsqrt(var + EPS))
            return jnp.concatenate(rows, axis=0)                # (C, HW)

        for b in range(bb):                                     # bb is small & static
            x_img = x_ref[b]                                    # (C, HW)
            y1 = conv_instnorm(x_img, w1_ref)
            y2 = conv_instnorm(y1, w2_ref)
            o_ref[b] = (y2 + x_img).astype(o_ref.dtype)

    return kernel


def _round_up(x, m):
    return ((x + m - 1) // m) * m


def _phys_f32_bytes(*shape):
    """Physical VMEM bytes for an f32 array (lanes padded to 128, sublanes to 8)."""
    if len(shape) == 1:
        shape = (1,) + tuple(shape)
    lead = int(np.prod(shape[:-2])) if len(shape) > 2 else 1
    return lead * _round_up(shape[-2], 8) * _round_up(shape[-1], 128) * 4


def _vmem_capacity_bytes():
    try:
        return int(pltpu.get_tpu_info().vmem_capacity_bytes)
    except Exception:
        return 64 << 20  # conservative (v7x per-core) fallback


def _pick_block_b(N, C, HW):
    """Images per grid step: largest divisor of N whose *physical* working set
    fits half the per-core VMEM, keeps >= 2 grid steps when N >= 2 (so the
    'parallel' batch axis can shard across v7x's two TensorCores), and stays
    <= 8 so the per-image Python unroll keeps code size bounded."""
    cap = _vmem_capacity_bytes()
    budget = cap // 2
    img = _phys_f32_bytes(C, HW)
    per_img = 4 * img + 16 * img          # double-buffered in+out blocks + temps (taps/acc/rows)
    fixed = 2 * 2 * _phys_f32_bytes(C * 9, C, 1) + 2 * _phys_f32_bytes(9, 1, HW)
    best = 1
    for bb in range(1, min(N, 8) + 1):
        if N % bb:
            continue
        if N >= 2 and N // bb < 2:        # keep >= 2 grid steps for v7x megacore
            continue
        if fixed + bb * per_img <= budget:
            best = bb
    return best, cap


def residual_block(x_nchw, w1_oihw, w2_oihw):
    """Pallas TPU implementation of SRGAN ResidualBlock. I/O is NCHW (like PyTorch)."""
    x = x_nchw.astype(jnp.float32)
    N, C, H, W = x.shape
    HW = H * W
    x2 = x.reshape(N, C, HW)              # pure reshape — no transpose, no HBM pass

    def prep_w(w):                        # OIHW (Cout,Cin,3,3) -> (Cout*9, Cin, 1), tap-major
        return jnp.transpose(w, (0, 2, 3, 1)).reshape(C * 9, C, 1).astype(jnp.float32)

    w1 = prep_w(w1_oihw)
    w2 = prep_w(w2_oihw)

    # 0/1 zero-padding masks for the 9 taps (compile-time numpy constants).
    p = np.arange(HW)
    row, col = p // W, p % W
    masks = np.stack(
        [((row + dy >= 0) & (row + dy < H) & (col + dx >= 0) & (col + dx < W))
         .astype(np.float32) for dy, dx in _TAPS],
        axis=0).reshape(9, 1, HW)
    masks = jnp.asarray(masks)

    bb, cap = _pick_block_b(N, C, HW)
    grid = (N // bb,)
    vmem_limit = int(min(cap // 2, 64 << 20))

    out = pl.pallas_call(
        _make_kernel(H, W),
        out_shape=jax.ShapeDtypeStruct((N, C, HW), jnp.float32),
        grid=grid,
        in_specs=[
            pl.BlockSpec((bb, C, HW), lambda n: (n, 0, 0)),
            pl.BlockSpec((C * 9, C, 1), lambda n: (0, 0, 0)),
            pl.BlockSpec((C * 9, C, 1), lambda n: (0, 0, 0)),
            pl.BlockSpec((9, 1, HW), lambda n: (0, 0, 0)),
        ],
        out_specs=pl.BlockSpec((bb, C, HW), lambda n: (n, 0, 0)),
        compiler_params=pltpu.CompilerParams(
            dimension_semantics=("parallel",),
            vmem_limit_bytes=vmem_limit),
    )(x2, w1, w2, masks)
    return out.reshape(N, C, H, W)


def residual_block_ref(x_nchw, w1_oihw, w2_oihw):
    """Pure-JAX reference matching PyTorch semantics (for verification)."""
    x = x_nchw.astype(jnp.float32)

    def conv_in(y, w):
        z = lax.conv_general_dilated(
            y, w.astype(jnp.float32), (1, 1), 'SAME',
            dimension_numbers=('NCHW', 'OIHW', 'NCHW'),
            precision=lax.Precision.HIGHEST)
        mean = jnp.mean(z, axis=(2, 3), keepdims=True)
        var = jnp.mean((z - mean) ** 2, axis=(2, 3), keepdims=True)
        return (z - mean) * lax.rsqrt(var + EPS)

    return conv_in(conv_in(x, w1_oihw), w2_oihw) + x


if __name__ == "__main__":
    key = jax.random.PRNGKey(0)
    k1, k2, k3 = jax.random.split(key, 3)
    N, C, H, W = 2, 4, 16, 16                      # ResidualBlock(dim=4) on 16x16 maps

    x = jax.random.normal(k1, (N, C, H, W), jnp.float32)
    # Conv2d(dim, dim, 3, 1, 1, bias=False) weight shape: (C, C, 3, 3)
    w1 = jax.random.normal(k2, (C, C, 3, 3), jnp.float32) * 0.1
    w2 = jax.random.normal(k3, (C, C, 3, 3), jnp.float32) * 0.1

    out = jax.block_until_ready(residual_block(x, w1, w2))
    ref = jax.block_until_ready(residual_block_ref(x, w1, w2))

    assert out.shape == (N, C, H, W), out.shape
    max_err = float(jnp.max(jnp.abs(out - ref)))
    assert jnp.allclose(out, ref, atol=1e-4, rtol=1e-4), max_err
    print("KERNEL_OK")
</pallas_src>

<mosaic_0001>
module attributes {stable_mosaic.version = 11 : i64} {
  func.func @kernel(%arg0: i32, %arg1: memref<1x4x256xf32, #tpu.memory_space<vmem>>, %arg2: memref<36x4x1xf32, #tpu.memory_space<vmem>>, %arg3: memref<36x4x1xf32, #tpu.memory_space<vmem>>, %arg4: memref<9x1x256xf32, #tpu.memory_space<vmem>>, %arg5: memref<1x4x256xf32, #tpu.memory_space<vmem>>) attributes {dimension_semantics = [#tpu.dimension_semantics<parallel>], iteration_bounds = array<i64: 2>, scalar_prefetch = 0 : i64, scratch_operands = 0 : i64, tpu.core_type = #tpu.core_type<tc>, window_params = [{transform_indices = @transform_0, window_bounds = array<i64: 1, 4, 256>}, {pipeline_mode = #tpu.pipeline_mode<synchronous>, transform_indices = @transform_1, window_bounds = array<i64: 36, 4, 1>}, {pipeline_mode = #tpu.pipeline_mode<synchronous>, transform_indices = @transform_2, window_bounds = array<i64: 36, 4, 1>}, {pipeline_mode = #tpu.pipeline_mode<synchronous>, transform_indices = @transform_3, window_bounds = array<i64: 9, 1, 256>}, {transform_indices = @transform_4, window_bounds = array<i64: 1, 4, 256>}]} {
    %c0 = arith.constant 0 : index
    %c0_0 = arith.constant 0 : index
    %c0_1 = arith.constant 0 : index
    %0 = vector.load %arg1[%c0, %c0_0, %c0_1] : memref<1x4x256xf32, #tpu.memory_space<vmem>>, vector<1x4x256xf32>
    %1 = vector.shape_cast %0 : vector<1x4x256xf32> to vector<4x256xf32>
    %c17_i32 = arith.constant 17 : i32
    %2 = tpu.dynamic_rotate %1 by %c17_i32 dim 1 : vector<4x256xf32>, i32 -> vector<4x256xf32>
    %c0_2 = arith.constant 0 : index
    %c0_3 = arith.constant 0 : index
    %c0_4 = arith.constant 0 : index
    %3 = vector.load %arg4[%c0_2, %c0_3, %c0_4] : memref<9x1x256xf32, #tpu.memory_space<vmem>>, vector<1x1x256xf32>
    %4 = vector.shape_cast %3 : vector<1x1x256xf32> to vector<1x256xf32>
    %5 = vector.broadcast %4 : vector<1x256xf32> to vector<4x256xf32>
    %6 = arith.mulf %2, %5 : vector<4x256xf32>
    %c16_i32 = arith.constant 16 : i32
    %7 = tpu.dynamic_rotate %1 by %c16_i32 dim 1 : vector<4x256xf32>, i32 -> vector<4x256xf32>
    %c1 = arith.constant 1 : index
    %c0_5 = arith.constant 0 : index
    %c0_6 = arith.constant 0 : index
    %8 = vector.load %arg4[%c1, %c0_5, %c0_6] : memref<9x1x256xf32, #tpu.memory_space<vmem>>, vector<1x1x256xf32>
    %9 = vector.shape_cast %8 : vector<1x1x256xf32> to vector<1x256xf32>
    %10 = vector.broadcast %9 : vector<1x256xf32> to vector<4x256xf32>
    %11 = arith.mulf %7, %10 : vector<4x256xf32>
    %c15_i32 = arith.constant 15 : i32
    %12 = tpu.dynamic_rotate %1 by %c15_i32 dim 1 : vector<4x256xf32>, i32 -> vector<4x256xf32>
    %c2 = arith.constant 2 : index
    %c0_7 = arith.constant 0 : index
    %c0_8 = arith.constant 0 : index
    %13 = vector.load %arg4[%c2, %c0_7, %c0_8] : memref<9x1x256xf32, #tpu.memory_space<vmem>>, vector<1x1x256xf32>
    %14 = vector.shape_cast %13 : vector<1x1x256xf32> to vector<1x256xf32>
    %15 = vector.broadcast %14 : vector<1x256xf32> to vector<4x256xf32>
    %16 = arith.mulf %12, %15 : vector<4x256xf32>
    %c1_i32 = arith.constant 1 : i32
    %17 = tpu.dynamic_rotate %1 by %c1_i32 dim 1 : vector<4x256xf32>, i32 -> vector<4x256xf32>
    %c3 = arith.constant 3 : index
    %c0_9 = arith.constant 0 : index
    %c0_10 = arith.constant 0 : index
    %18 = vector.load %arg4[%c3, %c0_9, %c0_10] : memref<9x1x256xf32, #tpu.memory_space<vmem>>, vector<1x1x256xf32>
    %19 = vector.shape_cast %18 : vector<1x1x256xf32> to vector<1x256xf32>
    %20 = vector.broadcast %19 : vector<1x256xf32> to vector<4x256xf32>
    %21 = arith.mulf %17, %20 : vector<4x256xf32>
    %c255_i32 = arith.constant 255 : i32
    %22 = tpu.dynamic_rotate %1 by %c255_i32 dim 1 : vector<4x256xf32>, i32 -> vector<4x256xf32>
    %c5 = arith.constant 5 : index
    %c0_11 = arith.constant 0 : index
    %c0_12 = arith.constant 0 : index
    %23 = vector.load %arg4[%c5, %c0_11, %c0_12] : memref<9x1x256xf32, #tpu.memory_space<vmem>>, vector<1x1x256xf32>
    %24 = vector.shape_cast %23 : vector<1x1x256xf32> to vector<1x256xf32>
    %25 = vector.broadcast %24 : vector<1x256xf32> to vector<4x256xf32>
    %26 = arith.mulf %22, %25 : vector<4x256xf32>
    %c241_i32 = arith.constant 241 : i32
    %27 = tpu.dynamic_rotate %1 by %c241_i32 dim 1 : vector<4x256xf32>, i32 -> vector<4x256xf32>
    %c6 = arith.constant 6 : index
    %c0_13 = arith.constant 0 : index
    %c0_14 = arith.constant 0 : index
    %28 = vector.load %arg4[%c6, %c0_13, %c0_14] : memref<9x1x256xf32, #tpu.memory_space<vmem>>, vector<1x1x256xf32>
    %29 = vector.shape_cast %28 : vector<1x1x256xf32> to vector<1x256xf32>
    %30 = vector.broadcast %29 : vector<1x256xf32> to vector<4x256xf32>
    %31 = arith.mulf %27, %30 : vector<4x256xf32>
    %c240_i32 = arith.constant 240 : i32
    %32 = tpu.dynamic_rotate %1 by %c240_i32 dim 1 : vector<4x256xf32>, i32 -> vector<4x256xf32>
    %c7 = arith.constant 7 : index
    %c0_15 = arith.constant 0 : index
    %c0_16 = arith.constant 0 : index
    %33 = vector.load %arg4[%c7, %c0_15, %c0_16] : memref<9x1x256xf32, #tpu.memory_space<vmem>>, vector<1x1x256xf32>
    %34 = vector.shape_cast %33 : vector<1x1x256xf32> to vector<1x256xf32>
    %35 = vector.broadcast %34 : vector<1x256xf32> to vector<4x256xf32>
    %36 = arith.mulf %32, %35 : vector<4x256xf32>
    %c239_i32 = arith.constant 239 : i32
    %37 = tpu.dynamic_rotate %1 by %c239_i32 dim 1 : vector<4x256xf32>, i32 -> vector<4x256xf32>
    %c8 = arith.constant 8 : index
    %c0_17 = arith.constant 0 : index
    %c0_18 = arith.constant 0 : index
    %38 = vector.load %arg4[%c8, %c0_17, %c0_18] : memref<9x1x256xf32, #tpu.memory_space<vmem>>, vector<1x1x256xf32>
    %39 = vector.shape_cast %38 : vector<1x1x256xf32> to vector<1x256xf32>
    %40 = vector.broadcast %39 : vector<1x256xf32> to vector<4x256xf32>
    %41 = arith.mulf %37, %40 : vector<4x256xf32>
    %c0_19 = arith.constant 0 : index
    %c0_20 = arith.constant 0 : index
    %c0_21 = arith.constant 0 : index
    %42 = vector.load %arg2[%c0_19, %c0_20, %c0_21] : memref<36x4x1xf32, #tpu.memory_space<vmem>>, vector<1x4x1xf32>
    %43 = vector.shape_cast %42 : vector<1x4x1xf32> to vector<4x1xf32>
    %44 = vector.broadcast %43 : vector<4x1xf32> to vector<4x256xf32>
    %45 = arith.mulf %6, %44 : vector<4x256xf32>
    %c1_22 = arith.constant 1 : index
    %c0_23 = arith.constant 0 : index
    %c0_24 = arith.constant 0 : index
    %46 = vector.load %arg2[%c1_22, %c0_23, %c0_24] : memref<36x4x1xf32, #tpu.memory_space<vmem>>, vector<1x4x1xf32>
    %47 = vector.shape_cast %46 : vector<1x4x1xf32> to vector<4x1xf32>
    %48 = vector.broadcast %47 : vector<4x1xf32> to vector<4x256xf32>
    %49 = arith.mulf %11, %48 : vector<4x256xf32>
    %50 = arith.addf %45, %49 : vector<4x256xf32>
    %c2_25 = arith.constant 2 : index
    %c0_26 = arith.constant 0 : index
    %c0_27 = arith.constant 0 : index
    %51 = vector.load %arg2[%c2_25, %c0_26, %c0_27] : memref<36x4x1xf32, #tpu.memory_space<vmem>>, vector<1x4x1xf32>
    %52 = vector.shape_cast %51 : vector<1x4x1xf32> to vector<4x1xf32>
    %53 = vector.broadcast %52 : vector<4x1xf32> to vector<4x256xf32>
    %54 = arith.mulf %16, %53 : vector<4x256xf32>
    %55 = arith.addf %50, %54 : vector<4x256xf32>
    %c3_28 = arith.constant 3 : index
    %c0_29 = arith.constant 0 : index
    %c0_30 = arith.constant 0 : index
    %56 = vector.load %arg2[%c3_28, %c0_29, %c0_30] : memref<36x4x1xf32, #tpu.memory_space<vmem>>, vector<1x4x1xf32>
    %57 = vector.shape_cast %56 : vector<1x4x1xf32> to vector<4x1xf32>
    %58 = vector.broadcast %57 : vector<4x1xf32> to vector<4x256xf32>
    %59 = arith.mulf %21, %58 : vector<4x256xf32>
    %60 = arith.addf %55, %59 : vector<4x256xf32>
    %c4 = arith.constant 4 : index
    %c0_31 = arith.constant 0 : index
    %c0_32 = arith.constant 0 : index
    %61 = vector.load %arg2[%c4, %c0_31, %c0_32] : memref<36x4x1xf32, #tpu.memory_space<vmem>>, vector<1x4x1xf32>
    %62 = vector.shape_cast %61 : vector<1x4x1xf32> to vector<4x1xf32>
    %63 = vector.broadcast %62 : vector<4x1xf32> to vector<4x256xf32>
    %64 = arith.mulf %1, %63 : vector<4x256xf32>
    %65 = arith.addf %60, %64 : vector<4x256xf32>
    %c5_33 = arith.constant 5 : index
    %c0_34 = arith.constant 0 : index
    %c0_35 = arith.constant 0 : index
    %66 = vector.load %arg2[%c5_33, %c0_34, %c0_35] : memref<36x4x1xf32, #tpu.memory_space<vmem>>, vector<1x4x1xf32>
    %67 = vector.shape_cast %66 : vector<1x4x1xf32> to vector<4x1xf32>
    %68 = vector.broadcast %67 : vector<4x1xf32> to vector<4x256xf32>
    %69 = arith.mulf %26, %68 : vector<4x256xf32>
    %70 = arith.addf %65, %69 : vector<4x256xf32>
    %c6_36 = arith.constant 6 : index
    %c0_37 = arith.constant 0 : index
    %c0_38 = arith.constant 0 : index
    %71 = vector.load %arg2[%c6_36, %c0_37, %c0_38] : memref<36x4x1xf32, #tpu.memory_space<vmem>>, vector<1x4x1xf32>
    %72 = vector.shape_cast %71 : vector<1x4x1xf32> to vector<4x1xf32>
    %73 = vector.broadcast %72 : vector<4x1xf32> to vector<4x256xf32>
    %74 = arith.mulf %31, %73 : vector<4x256xf32>
    %75 = arith.addf %70, %74 : vector<4x256xf32>
    %c7_39 = arith.constant 7 : index
    %c0_40 = arith.constant 0 : index
    %c0_41 = arith.constant 0 : index
    %76 = vector.load %arg2[%c7_39, %c0_40, %c0_41] : memref<36x4x1xf32, #tpu.memory_space<vmem>>, vector<1x4x1xf32>
    %77 = vector.shape_cast %76 : vector<1x4x1xf32> to vector<4x1xf32>
    %78 = vector.broadcast %77 : vector<4x1xf32> to vector<4x256xf32>
    %79 = arith.mulf %36, %78 : vector<4x256xf32>
    %80 = arith.addf %75, %79 : vector<4x256xf32>
    %c8_42 = arith.constant 8 : index
    %c0_43 = arith.constant 0 : index
    %c0_44 = arith.constant 0 : index
    %81 = vector.load %arg2[%c8_42, %c0_43, %c0_44] : memref<36x4x1xf32, #tpu.memory_space<vmem>>, vector<1x4x1xf32>
    %82 = vector.shape_cast %81 : vector<1x4x1xf32> to vector<4x1xf32>
    %83 = vector.broadcast %82 : vector<4x1xf32> to vector<4x256xf32>
    %84 = arith.mulf %41, %83 : vector<4x256xf32>
    %85 = arith.addf %80, %84 : vector<4x256xf32>
    %cst = arith.constant dense<0.000000e+00> : vector<256xf32>
    %86 = vector.multi_reduction <add>, %85, %cst [0] : vector<4x256xf32> to vector<256xf32>
    %87 = vector.shape_cast %86 : vector<256xf32> to vector<1x256xf32>
    %88 = vector.shape_cast %87 : vector<1x256xf32> to vector<1x1x256xf32>
    %cst_45 = arith.constant dense<0.000000e+00> : vector<1xf32>
    %89 = vector.multi_reduction <add>, %88, %cst_45 [1, 2] : vector<1x1x256xf32> to vector<1xf32>
    %90 = vector.shape_cast %89 : vector<1xf32> to vector<1x1x1xf32>
    %91 = vector.extract %90[0, 0, 0] : f32 from vector<1x1x1xf32>
    %92 = arith.mulf %87, %87 : vector<1x256xf32>
    %93 = vector.shape_cast %92 : vector<1x256xf32> to vector<1x1x256xf32>
    %cst_46 = arith.constant dense<0.000000e+00> : vector<1xf32>
    %94 = vector.multi_reduction <add>, %93, %cst_46 [1, 2] : vector<1x1x256xf32> to vector<1xf32>
    %95 = vector.shape_cast %94 : vector<1xf32> to vector<1x1x1xf32>
    %96 = vector.extract %95[0, 0, 0] : f32 from vector<1x1x1xf32>
    %cst_47 = arith.constant 3.906250e-03 : f32
    %97 = arith.mulf %91, %cst_47 : f32
    %cst_48 = arith.constant 3.906250e-03 : f32
    %98 = arith.mulf %96, %cst_48 : f32
    %99 = arith.mulf %97, %97 : f32
    %100 = arith.subf %98, %99 : f32
    %101 = vector.broadcast %97 : f32 to vector<1x256xf32>
    %102 = arith.subf %87, %101 : vector<1x256xf32>
    %cst_49 = arith.constant 9.99999974E-6 : f32
    %103 = arith.addf %100, %cst_49 : f32
    %104 = math.rsqrt %103 : f32
    %105 = vector.broadcast %104 : f32 to vector<1x256xf32>
    %106 = arith.mulf %102, %105 : vector<1x256xf32>
    %c9 = arith.constant 9 : index
    %c0_50 = arith.constant 0 : index
    %c0_51 = arith.constant 0 : index
    %107 = vector.load %arg2[%c9, %c0_50, %c0_51] : memref<36x4x1xf32, #tpu.memory_space<vmem>>, vector<1x4x1xf32>
    %108 = vector.shape_cast %107 : vector<1x4x1xf32> to vector<4x1xf32>
    %109 = vector.broadcast %108 : vector<4x1xf32> to vector<4x256xf32>
    %110 = arith.mulf %6, %109 : vector<4x256xf32>
    %c10 = arith.constant 10 : index
    %c0_52 = arith.constant 0 : index
    %c0_53 = arith.constant 0 : index
    %111 = vector.load %arg2[%c10, %c0_52, %c0_53] : memref<36x4x1xf32, #tpu.memory_space<vmem>>, vector<1x4x1xf32>
    %112 = vector.shape_cast %111 : vector<1x4x1xf32> to vector<4x1xf32>
    %113 = vector.broadcast %112 : vector<4x1xf32> to vector<4x256xf32>
    %114 = arith.mulf %11, %113 : vector<4x256xf32>
    %115 = arith.addf %110, %114 : vector<4x256xf32>
    %c11 = arith.constant 11 : index
    %c0_54 = arith.constant 0 : index
    %c0_55 = arith.constant 0 : index
    %116 = vector.load %arg2[%c11, %c0_54, %c0_55] : memref<36x4x1xf32, #tpu.memory_space<vmem>>, vector<1x4x1xf32>
    %117 = vector.shape_cast %116 : vector<1x4x1xf32> to vector<4x1xf32>
    %118 = vector.broadcast %117 : vector<4x1xf32> to vector<4x256xf32>
    %119 = arith.mulf %16, %118 : vector<4x256xf32>
    %120 = arith.addf %115, %119 : vector<4x256xf32>
    %c12 = arith.constant 12 : index
    %c0_56 = arith.constant 0 : index
    %c0_57 = arith.constant 0 : index
    %121 = vector.load %arg2[%c12, %c0_56, %c0_57] : memref<36x4x1xf32, #tpu.memory_space<vmem>>, vector<1x4x1xf32>
    %122 = vector.shape_cast %121 : vector<1x4x1xf32> to vector<4x1xf32>
    %123 = vector.broadcast %122 : vector<4x1xf32> to vector<4x256xf32>
    %124 = arith.mulf %21, %123 : vector<4x256xf32>
    %125 = arith.addf %120, %124 : vector<4x256xf32>
    %c13 = arith.constant 13 : index
    %c0_58 = arith.constant 0 : index
    %c0_59 = arith.constant 0 : index
    %126 = vector.load %arg2[%c13, %c0_58, %c0_59] : memref<36x4x1xf32, #tpu.memory_space<vmem>>, vector<1x4x1xf32>
    %127 = vector.shape_cast %126 : vector<1x4x1xf32> to vector<4x1xf32>
    %128 = vector.broadcast %127 : vector<4x1xf32> to vector<4x256xf32>
    %129 = arith.mulf %1, %128 : vector<4x256xf32>
    %130 = arith.addf %125, %129 : vector<4x256xf32>
    %c14 = arith.constant 14 : index
    %c0_60 = arith.constant 0 : index
    %c0_61 = arith.constant 0 : index
    %131 = vector.load %arg2[%c14, %c0_60, %c0_61] : memref<36x4x1xf32, #tpu.memory_space<vmem>>, vector<1x4x1xf32>
    %132 = vector.shape_cast %131 : vector<1x4x1xf32> to vector<4x1xf32>
    %133 = vector.broadcast %132 : vector<4x1xf32> to vector<4x256xf32>
    %134 = arith.mulf %26, %133 : vector<4x256xf32>
    %135 = arith.addf %130, %134 : vector<4x256xf32>
    %c15 = arith.constant 15 : index
    %c0_62 = arith.constant 0 : index
    %c0_63 = arith.constant 0 : index
    %136 = vector.load %arg2[%c15, %c0_62, %c0_63] : memref<36x4x1xf32, #tpu.memory_space<vmem>>, vector<1x4x1xf32>
    %137 = vector.shape_cast %136 : vector<1x4x1xf32> to vector<4x1xf32>
    %138 = vector.broadcast %137 : vector<4x1xf32> to vector<4x256xf32>
    %139 = arith.mulf %31, %138 : vector<4x256xf32>
    %140 = arith.addf %135, %139 : vector<4x256xf32>
    %c16 = arith.constant 16 : index
    %c0_64 = arith.constant 0 : index
    %c0_65 = arith.constant 0 : index
    %141 = vector.load %arg2[%c16, %c0_64, %c0_65] : memref<36x4x1xf32, #tpu.memory_space<vmem>>, vector<1x4x1xf32>
    %142 = vector.shape_cast %141 : vector<1x4x1xf32> to vector<4x1xf32>
    %143 = vector.broadcast %142 : vector<4x1xf32> to vector<4x256xf32>
    %144 = arith.mulf %36, %143 : vector<4x256xf32>
    %145 = arith.addf %140, %144 : vector<4x256xf32>
    %c17 = arith.constant 17 : index
    %c0_66 = arith.constant 0 : index
    %c0_67 = arith.constant 0 : index
    %146 = vector.load %arg2[%c17, %c0_66, %c0_67] : memref<36x4x1xf32, #tpu.memory_space<vmem>>, vector<1x4x1xf32>
    %147 = vector.shape_cast %146 : vector<1x4x1xf32> to vector<4x1xf32>
    %148 = vector.broadcast %147 : vector<4x1xf32> to vector<4x256xf32>
    %149 = arith.mulf %41, %148 : vector<4x256xf32>
    %150 = arith.addf %145, %149 : vector<4x256xf32>
    %cst_68 = arith.constant dense<0.000000e+00> : vector<256xf32>
    %151 = vector.multi_reduction <add>, %150, %cst_68 [0] : vector<4x256xf32> to vector<256xf32>
    %152 = vector.shape_cast %151 : vector<256xf32> to vector<1x256xf32>
    %153 = vector.shape_cast %152 : vector<1x256xf32> to vector<1x1x256xf32>
    %cst_69 = arith.constant dense<0.000000e+00> : vector<1xf32>
    %154 = vector.multi_reduction <add>, %153, %cst_69 [1, 2] : vector<1x1x256xf32> to vector<1xf32>
    %155 = vector.shape_cast %154 : vector<1xf32> to vector<1x1x1xf32>
    %156 = vector.extract %155[0, 0, 0] : f32 from vector<1x1x1xf32>
    %157 = arith.mulf %152, %152 : vector<1x256xf32>
    %158 = vector.shape_cast %157 : vector<1x256xf32> to vector<1x1x256xf32>
    %cst_70 = arith.constant dense<0.000000e+00> : vector<1xf32>
    %159 = vector.multi_reduction <add>, %158, %cst_70 [1, 2] : vector<1x1x256xf32> to vector<1xf32>
    %160 = vector.shape_cast %159 : vector<1xf32> to vector<1x1x1xf32>
    %161 = vector.extract %160[0, 0, 0] : f32 from vector<1x1x1xf32>
    %cst_71 = arith.constant 3.906250e-03 : f32
    %162 = arith.mulf %156, %cst_71 : f32
    %cst_72 = arith.constant 3.906250e-03 : f32
    %163 = arith.mulf %161, %cst_72 : f32
    %164 = arith.mulf %162, %162 : f32
    %165 = arith.subf %163, %164 : f32
    %166 = vector.broadcast %162 : f32 to vector<1x256xf32>
    %167 = arith.subf %152, %166 : vector<1x256xf32>
    %cst_73 = arith.constant 9.99999974E-6 : f32
    %168 = arith.addf %165, %cst_73 : f32
    %169 = math.rsqrt %168 : f32
    %170 = vector.broadcast %169 : f32 to vector<1x256xf32>
    %171 = arith.mulf %167, %170 : vector<1x256xf32>
    %c18 = arith.constant 18 : index
    %c0_74 = arith.constant 0 : index
    %c0_75 = arith.constant 0 : index
    %172 = vector.load %arg2[%c18, %c0_74, %c0_75] : memref<36x4x1xf32, #tpu.memory_space<vmem>>, vector<1x4x1xf32>
    %173 = vector.shape_cast %172 : vector<1x4x1xf32> to vector<4x1xf32>
    %174 = vector.broadcast %173 : vector<4x1xf32> to vector<4x256xf32>
    %175 = arith.mulf %6, %174 : vector<4x256xf32>
    %c19 = arith.constant 19 : index
    %c0_76 = arith.constant 0 : index
    %c0_77 = arith.constant 0 : index
    %176 = vector.load %arg2[%c19, %c0_76, %c0_77] : memref<36x4x1xf32, #tpu.memory_space<vmem>>, vector<1x4x1xf32>
    %177 = vector.shape_cast %176 : vector<1x4x1xf32> to vector<4x1xf32>
    %178 = vector.broadcast %177 : vector<4x1xf32> to vector<4x256xf32>
    %179 = arith.mulf %11, %178 : vector<4x256xf32>
    %180 = arith.addf %175, %179 : vector<4x256xf32>
    %c20 = arith.constant 20 : index
    %c0_78 = arith.constant 0 : index
    %c0_79 = arith.constant 0 : index
    %181 = vector.load %arg2[%c20, %c0_78, %c0_79] : memref<36x4x1xf32, #tpu.memory_space<vmem>>, vector<1x4x1xf32>
    %182 = vector.shape_cast %181 : vector<1x4x1xf32> to vector<4x1xf32>
    %183 = vector.broadcast %182 : vector<4x1xf32> to vector<4x256xf32>
    %184 = arith.mulf %16, %183 : vector<4x256xf32>
    %185 = arith.addf %180, %184 : vector<4x256xf32>
    %c21 = arith.constant 21 : index
    %c0_80 = arith.constant 0 : index
    %c0_81 = arith.constant 0 : index
    %186 = vector.load %arg2[%c21, %c0_80, %c0_81] : memref<36x4x1xf32, #tpu.memory_space<vmem>>, vector<1x4x1xf32>
    %187 = vector.shape_cast %186 : vector<1x4x1xf32> to vector<4x1xf32>
    %188 = vector.broadcast %187 : vector<4x1xf32> to vector<4x256xf32>
    %189 = arith.mulf %21, %188 : vector<4x256xf32>
    %190 = arith.addf %185, %189 : vector<4x256xf32>
    %c22 = arith.constant 22 : index
    %c0_82 = arith.constant 0 : index
    %c0_83 = arith.constant 0 : index
    %191 = vector.load %arg2[%c22, %c0_82, %c0_83] : memref<36x4x1xf32, #tpu.memory_space<vmem>>, vector<1x4x1xf32>
    %192 = vector.shape_cast %191 : vector<1x4x1xf32> to vector<4x1xf32>
    %193 = vector.broadcast %192 : vector<4x1xf32> to vector<4x256xf32>
    %194 = arith.mulf %1, %193 : vector<4x256xf32>
    %195 = arith.addf %190, %194 : vector<4x256xf32>
    %c23 = arith.constant 23 : index
    %c0_84 = arith.constant 0 : index
    %c0_85 = arith.constant 0 : index
    %196 = vector.load %arg2[%c23, %c0_84, %c0_85] : memref<36x4x1xf32, #tpu.memory_space<vmem>>, vector<1x4x1xf32>
    %197 = vector.shape_cast %196 : vector<1x4x1xf32> to vector<4x1xf32>
    %198 = vector.broadcast %197 : vector<4x1xf32> to vector<4x256xf32>
    %199 = arith.mulf %26, %198 : vector<4x256xf32>
    %200 = arith.addf %195, %199 : vector<4x256xf32>
    %c24 = arith.constant 24 : index
    %c0_86 = arith.constant 0 : index
    %c0_87 = arith.constant 0 : index
    %201 = vector.load %arg2[%c24, %c0_86, %c0_87] : memref<36x4x1xf32, #tpu.memory_space<vmem>>, vector<1x4x1xf32>
    %202 = vector.shape_cast %201 : vector<1x4x1xf32> to vector<4x1xf32>
    %203 = vector.broadcast %202 : vector<4x1xf32> to vector<4x256xf32>
    %204 = arith.mulf %31, %203 : vector<4x256xf32>
    %205 = arith.addf %200, %204 : vector<4x256xf32>
    %c25 = arith.constant 25 : index
    %c0_88 = arith.constant 0 : index
    %c0_89 = arith.constant 0 : index
    %206 = vector.load %arg2[%c25, %c0_88, %c0_89] : memref<36x4x1xf32, #tpu.memory_space<vmem>>, vector<1x4x1xf32>
    %207 = vector.shape_cast %206 : vector<1x4x1xf32> to vector<4x1xf32>
    %208 = vector.broadcast %207 : vector<4x1xf32> to vector<4x256xf32>
    %209 = arith.mulf %36, %208 : vector<4x256xf32>
    %210 = arith.addf %205, %209 : vector<4x256xf32>
    %c26 = arith.constant 26 : index
    %c0_90 = arith.constant 0 : index
    %c0_91 = arith.constant 0 : index
    %211 = vector.load %arg2[%c26, %c0_90, %c0_91] : memref<36x4x1xf32, #tpu.memory_space<vmem>>, vector<1x4x1xf32>
    %212 = vector.shape_cast %211 : vector<1x4x1xf32> to vector<4x1xf32>
    %213 = vector.broadcast %212 : vector<4x1xf32> to vector<4x256xf32>
    %214 = arith.mulf %41, %213 : vector<4x256xf32>
    %215 = arith.addf %210, %214 : vector<4x256xf32>
    %cst_92 = arith.constant dense<0.000000e+00> : vector<256xf32>
    %216 = vector.multi_reduction <add>, %215, %cst_92 [0] : vector<4x256xf32> to vector<256xf32>
    %217 = vector.shape_cast %216 : vector<256xf32> to vector<1x256xf32>
    %218 = vector.shape_cast %217 : vector<1x256xf32> to vector<1x1x256xf32>
    %cst_93 = arith.constant dense<0.000000e+00> : vector<1xf32>
    %219 = vector.multi_reduction <add>, %218, %cst_93 [1, 2] : vector<1x1x256xf32> to vector<1xf32>
    %220 = vector.shape_cast %219 : vector<1xf32> to vector<1x1x1xf32>
    %221 = vector.extract %220[0, 0, 0] : f32 from vector<1x1x1xf32>
    %222 = arith.mulf %217, %217 : vector<1x256xf32>
    %223 = vector.shape_cast %222 : vector<1x256xf32> to vector<1x1x256xf32>
    %cst_94 = arith.constant dense<0.000000e+00> : vector<1xf32>
    %224 = vector.multi_reduction <add>, %223, %cst_94 [1, 2] : vector<1x1x256xf32> to vector<1xf32>
    %225 = vector.shape_cast %224 : vector<1xf32> to vector<1x1x1xf32>
    %226 = vector.extract %225[0, 0, 0] : f32 from vector<1x1x1xf32>
    %cst_95 = arith.constant 3.906250e-03 : f32
    %227 = arith.mulf %221, %cst_95 : f32
    %cst_96 = arith.constant 3.906250e-03 : f32
    %228 = arith.mulf %226, %cst_96 : f32
    %229 = arith.mulf %227, %227 : f32
    %230 = arith.subf %228, %229 : f32
    %231 = vector.broadcast %227 : f32 to vector<1x256xf32>
    %232 = arith.subf %217, %231 : vector<1x256xf32>
    %cst_97 = arith.constant 9.99999974E-6 : f32
    %233 = arith.addf %230, %cst_97 : f32
    %234 = math.rsqrt %233 : f32
    %235 = vector.broadcast %234 : f32 to vector<1x256xf32>
    %236 = arith.mulf %232, %235 : vector<1x256xf32>
    %c27 = arith.constant 27 : index
    %c0_98 = arith.constant 0 : index
    %c0_99 = arith.constant 0 : index
    %237 = vector.load %arg2[%c27, %c0_98, %c0_99] : memref<36x4x1xf32, #tpu.memory_space<vmem>>, vector<1x4x1xf32>
    %238 = vector.shape_cast %237 : vector<1x4x1xf32> to vector<4x1xf32>
    %239 = vector.broadcast %238 : vector<4x1xf32> to vector<4x256xf32>
    %240 = arith.mulf %6, %239 : vector<4x256xf32>
    %c28 = arith.constant 28 : index
    %c0_100 = arith.constant 0 : index
    %c0_101 = arith.constant 0 : index
    %241 = vector.load %arg2[%c28, %c0_100, %c0_101] : memref<36x4x1xf32, #tpu.memory_space<vmem>>, vector<1x4x1xf32>
    %242 = vector.shape_cast %241 : vector<1x4x1xf32> to vector<4x1xf32>
    %243 = vector.broadcast %242 : vector<4x1xf32> to vector<4x256xf32>
    %244 = arith.mulf %11, %243 : vector<4x256xf32>
    %245 = arith.addf %240, %244 : vector<4x256xf32>
    %c29 = arith.constant 29 : index
    %c0_102 = arith.constant 0 : index
    %c0_103 = arith.constant 0 : index
    %246 = vector.load %arg2[%c29, %c0_102, %c0_103] : memref<36x4x1xf32, #tpu.memory_space<vmem>>, vector<1x4x1xf32>
    %247 = vector.shape_cast %246 : vector<1x4x1xf32> to vector<4x1xf32>
    %248 = vector.broadcast %247 : vector<4x1xf32> to vector<4x256xf32>
    %249 = arith.mulf %16, %248 : vector<4x256xf32>
    %250 = arith.addf %245, %249 : vector<4x256xf32>
    %c30 = arith.constant 30 : index
    %c0_104 = arith.constant 0 : index
    %c0_105 = arith.constant 0 : index
    %251 = vector.load %arg2[%c30, %c0_104, %c0_105] : memref<36x4x1xf32, #tpu.memory_space<vmem>>, vector<1x4x1xf32>
    %252 = vector.shape_cast %251 : vector<1x4x1xf32> to vector<4x1xf32>
    %253 = vector.broadcast %252 : vector<4x1xf32> to vector<4x256xf32>
    %254 = arith.mulf %21, %253 : vector<4x256xf32>
    %255 = arith.addf %250, %254 : vector<4x256xf32>
    %c31 = arith.constant 31 : index
    %c0_106 = arith.constant 0 : index
    %c0_107 = arith.constant 0 : index
    %256 = vector.load %arg2[%c31, %c0_106, %c0_107] : memref<36x4x1xf32, #tpu.memory_space<vmem>>, vector<1x4x1xf32>
    %257 = vector.shape_cast %256 : vector<1x4x1xf32> to vector<4x1xf32>
    %258 = vector.broadcast %257 : vector<4x1xf32> to vector<4x256xf32>
    %259 = arith.mulf %1, %258 : vector<4x256xf32>
    %260 = arith.addf %255, %259 : vector<4x256xf32>
    %c32 = arith.constant 32 : index
    %c0_108 = arith.constant 0 : index
    %c0_109 = arith.constant 0 : index
    %261 = vector.load %arg2[%c32, %c0_108, %c0_109] : memref<36x4x1xf32, #tpu.memory_space<vmem>>, vector<1x4x1xf32>
    %262 = vector.shape_cast %261 : vector<1x4x1xf32> to vector<4x1xf32>
    %263 = vector.broadcast %262 : vector<4x1xf32> to vector<4x256xf32>
    %264 = arith.mulf %26, %263 : vector<4x256xf32>
    %265 = arith.addf %260, %264 : vector<4x256xf32>
    %c33 = arith.constant 33 : index
    %c0_110 = arith.constant 0 : index
    %c0_111 = arith.constant 0 : index
    %266 = vector.load %arg2[%c33, %c0_110, %c0_111] : memref<36x4x1xf32, #tpu.memory_space<vmem>>, vector<1x4x1xf32>
    %267 = vector.shape_cast %266 : vector<1x4x1xf32> to vector<4x1xf32>
    %268 = vector.broadcast %267 : vector<4x1xf32> to vector<4x256xf32>
    %269 = arith.mulf %31, %268 : vector<4x256xf32>
    %270 = arith.addf %265, %269 : vector<4x256xf32>
    %c34 = arith.constant 34 : index
    %c0_112 = arith.constant 0 : index
    %c0_113 = arith.constant 0 : index
    %271 = vector.load %arg2[%c34, %c0_112, %c0_113] : memref<36x4x1xf32, #tpu.memory_space<vmem>>, vector<1x4x1xf32>
    %272 = vector.shape_cast %271 : vector<1x4x1xf32> to vector<4x1xf32>
    %273 = vector.broadcast %272 : vector<4x1xf32> to vector<4x256xf32>
    %274 = arith.mulf %36, %273 : vector<4x256xf32>
    %275 = arith.addf %270, %274 : vector<4x256xf32>
    %c35 = arith.constant 35 : index
    %c0_114 = arith.constant 0 : index
    %c0_115 = arith.constant 0 : index
    %276 = vector.load %arg2[%c35, %c0_114, %c0_115] : memref<36x4x1xf32, #tpu.memory_space<vmem>>, vector<1x4x1xf32>
    %277 = vector.shape_cast %276 : vector<1x4x1xf32> to vector<4x1xf32>
    %278 = vector.broadcast %277 : vector<4x1xf32> to vector<4x256xf32>
    %279 = arith.mulf %41, %278 : vector<4x256xf32>
    %280 = arith.addf %275, %279 : vector<4x256xf32>
    %cst_116 = arith.constant dense<0.000000e+00> : vector<256xf32>
    %281 = vector.multi_reduction <add>, %280, %cst_116 [0] : vector<4x256xf32> to vector<256xf32>
    %282 = vector.shape_cast %281 : vector<256xf32> to vector<1x256xf32>
    %283 = vector.shape_cast %282 : vector<1x256xf32> to vector<1x1x256xf32>
    %cst_117 = arith.constant dense<0.000000e+00> : vector<1xf32>
    %284 = vector.multi_reduction <add>, %283, %cst_117 [1, 2] : vector<1x1x256xf32> to vector<1xf32>
    %285 = vector.shape_cast %284 : vector<1xf32> to vector<1x1x1xf32>
    %286 = vector.extract %285[0, 0, 0] : f32 from vector<1x1x1xf32>
    %287 = arith.mulf %282, %282 : vector<1x256xf32>
    %288 = vector.shape_cast %287 : vector<1x256xf32> to vector<1x1x256xf32>
    %cst_118 = arith.constant dense<0.000000e+00> : vector<1xf32>
    %289 = vector.multi_reduction <add>, %288, %cst_118 [1, 2] : vector<1x1x256xf32> to vector<1xf32>
    %290 = vector.shape_cast %289 : vector<1xf32> to vector<1x1x1xf32>
    %291 = vector.extract %290[0, 0, 0] : f32 from vector<1x1x1xf32>
    %cst_119 = arith.constant 3.906250e-03 : f32
    %292 = arith.mulf %286, %cst_119 : f32
    %cst_120 = arith.constant 3.906250e-03 : f32
    %293 = arith.mulf %291, %cst_120 : f32
    %294 = arith.mulf %292, %292 : f32
    %295 = arith.subf %293, %294 : f32
    %296 = vector.broadcast %292 : f32 to vector<1x256xf32>
    %297 = arith.subf %282, %296 : vector<1x256xf32>
    %cst_121 = arith.constant 9.99999974E-6 : f32
    %298 = arith.addf %295, %cst_121 : f32
    %299 = math.rsqrt %298 : f32
    %300 = vector.broadcast %299 : f32 to vector<1x256xf32>
    %301 = arith.mulf %297, %300 : vector<1x256xf32>
    %302 = tpu.concatenate %106, %171, %236, %301 in 0 : vector<1x256xf32>, vector<1x256xf32>, vector<1x256xf32>, vector<1x256xf32> -> vector<4x256xf32>
    %c17_i32_122 = arith.constant 17 : i32
    %303 = tpu.dynamic_rotate %302 by %c17_i32_122 dim 1 : vector<4x256xf32>, i32 -> vector<4x256xf32>
    %c0_123 = arith.constant 0 : index
    %c0_124 = arith.constant 0 : index
    %c0_125 = arith.constant 0 : index
    %304 = vector.load %arg4[%c0_123, %c0_124, %c0_125] : memref<9x1x256xf32, #tpu.memory_space<vmem>>, vector<1x1x256xf32>
    %305 = vector.shape_cast %304 : vector<1x1x256xf32> to vector<1x256xf32>
    %306 = vector.broadcast %305 : vector<1x256xf32> to vector<4x256xf32>
    %307 = arith.mulf %303, %306 : vector<4x256xf32>
    %c16_i32_126 = arith.constant 16 : i32
    %308 = tpu.dynamic_rotate %302 by %c16_i32_126 dim 1 : vector<4x256xf32>, i32 -> vector<4x256xf32>
    %c1_127 = arith.constant 1 : index
    %c0_128 = arith.constant 0 : index
    %c0_129 = arith.constant 0 : index
    %309 = vector.load %arg4[%c1_127, %c0_128, %c0_129] : memref<9x1x256xf32, #tpu.memory_space<vmem>>, vector<1x1x256xf32>
    %310 = vector.shape_cast %309 : vector<1x1x256xf32> to vector<1x256xf32>
    %311 = vector.broadcast %310 : vector<1x256xf32> to vector<4x256xf32>
    %312 = arith.mulf %308, %311 : vector<4x256xf32>
    %c15_i32_130 = arith.constant 15 : i32
    %313 = tpu.dynamic_rotate %302 by %c15_i32_130 dim 1 : vector<4x256xf32>, i32 -> vector<4x256xf32>
    %c2_131 = arith.constant 2 : index
    %c0_132 = arith.constant 0 : index
    %c0_133 = arith.constant 0 : index
    %314 = vector.load %arg4[%c2_131, %c0_132, %c0_133] : memref<9x1x256xf32, #tpu.memory_space<vmem>>, vector<1x1x256xf32>
    %315 = vector.shape_cast %314 : vector<1x1x256xf32> to vector<1x256xf32>
    %316 = vector.broadcast %315 : vector<1x256xf32> to vector<4x256xf32>
    %317 = arith.mulf %313, %316 : vector<4x256xf32>
    %c1_i32_134 = arith.constant 1 : i32
    %318 = tpu.dynamic_rotate %302 by %c1_i32_134 dim 1 : vector<4x256xf32>, i32 -> vector<4x256xf32>
    %c3_135 = arith.constant 3 : index
    %c0_136 = arith.constant 0 : index
    %c0_137 = arith.constant 0 : index
    %319 = vector.load %arg4[%c3_135, %c0_136, %c0_137] : memref<9x1x256xf32, #tpu.memory_space<vmem>>, vector<1x1x256xf32>
    %320 = vector.shape_cast %319 : vector<1x1x256xf32> to vector<1x256xf32>
    %321 = vector.broadcast %320 : vector<1x256xf32> to vector<4x256xf32>
    %322 = arith.mulf %318, %321 : vector<4x256xf32>
    %c255_i32_138 = arith.constant 255 : i32
    %323 = tpu.dynamic_rotate %302 by %c255_i32_138 dim 1 : vector<4x256xf32>, i32 -> vector<4x256xf32>
    %c5_139 = arith.constant 5 : index
    %c0_140 = arith.constant 0 : index
    %c0_141 = arith.constant 0 : index
    %324 = vector.load %arg4[%c5_139, %c0_140, %c0_141] : memref<9x1x256xf32, #tpu.memory_space<vmem>>, vector<1x1x256xf32>
    %325 = vector.shape_cast %324 : vector<1x1x256xf32> to vector<1x256xf32>
    %326 = vector.broadcast %325 : vector<1x256xf32> to vector<4x256xf32>
    %327 = arith.mulf %323, %326 : vector<4x256xf32>
    %c241_i32_142 = arith.constant 241 : i32
    %328 = tpu.dynamic_rotate %302 by %c241_i32_142 dim 1 : vector<4x256xf32>, i32 -> vector<4x256xf32>
    %c6_143 = arith.constant 6 : index
    %c0_144 = arith.constant 0 : index
    %c0_145 = arith.constant 0 : index
    %329 = vector.load %arg4[%c6_143, %c0_144, %c0_145] : memref<9x1x256xf32, #tpu.memory_space<vmem>>, vector<1x1x256xf32>
    %330 = vector.shape_cast %329 : vector<1x1x256xf32> to vector<1x256xf32>
    %331 = vector.broadcast %330 : vector<1x256xf32> to vector<4x256xf32>
    %332 = arith.mulf %328, %331 : vector<4x256xf32>
    %c240_i32_146 = arith.constant 240 : i32
    %333 = tpu.dynamic_rotate %302 by %c240_i32_146 dim 1 : vector<4x256xf32>, i32 -> vector<4x256xf32>
    %c7_147 = arith.constant 7 : index
    %c0_148 = arith.constant 0 : index
    %c0_149 = arith.constant 0 : index
    %334 = vector.load %arg4[%c7_147, %c0_148, %c0_149] : memref<9x1x256xf32, #tpu.memory_space<vmem>>, vector<1x1x256xf32>
    %335 = vector.shape_cast %334 : vector<1x1x256xf32> to vector<1x256xf32>
    %336 = vector.broadcast %335 : vector<1x256xf32> to vector<4x256xf32>
    %337 = arith.mulf %333, %336 : vector<4x256xf32>
    %c239_i32_150 = arith.constant 239 : i32
    %338 = tpu.dynamic_rotate %302 by %c239_i32_150 dim 1 : vector<4x256xf32>, i32 -> vector<4x256xf32>
    %c8_151 = arith.constant 8 : index
    %c0_152 = arith.constant 0 : index
    %c0_153 = arith.constant 0 : index
    %339 = vector.load %arg4[%c8_151, %c0_152, %c0_153] : memref<9x1x256xf32, #tpu.memory_space<vmem>>, vector<1x1x256xf32>
    %340 = vector.shape_cast %339 : vector<1x1x256xf32> to vector<1x256xf32>
    %341 = vector.broadcast %340 : vector<1x256xf32> to vector<4x256xf32>
    %342 = arith.mulf %338, %341 : vector<4x256xf32>
    %c0_154 = arith.constant 0 : index
    %c0_155 = arith.constant 0 : index
    %c0_156 = arith.constant 0 : index
    %343 = vector.load %arg3[%c0_154, %c0_155, %c0_156] : memref<36x4x1xf32, #tpu.memory_space<vmem>>, vector<1x4x1xf32>
    %344 = vector.shape_cast %343 : vector<1x4x1xf32> to vector<4x1xf32>
    %345 = vector.broadcast %344 : vector<4x1xf32> to vector<4x256xf32>
    %346 = arith.mulf %307, %345 : vector<4x256xf32>
    %c1_157 = arith.constant 1 : index
    %c0_158 = arith.constant 0 : index
    %c0_159 = arith.constant 0 : index
    %347 = vector.load %arg3[%c1_157, %c0_158, %c0_159] : memref<36x4x1xf32, #tpu.memory_space<vmem>>, vector<1x4x1xf32>
    %348 = vector.shape_cast %347 : vector<1x4x1xf32> to vector<4x1xf32>
    %349 = vector.broadcast %348 : vector<4x1xf32> to vector<4x256xf32>
    %350 = arith.mulf %312, %349 : vector<4x256xf32>
    %351 = arith.addf %346, %350 : vector<4x256xf32>
    %c2_160 = arith.constant 2 : index
    %c0_161 = arith.constant 0 : index
    %c0_162 = arith.constant 0 : index
    %352 = vector.load %arg3[%c2_160, %c0_161, %c0_162] : memref<36x4x1xf32, #tpu.memory_space<vmem>>, vector<1x4x1xf32>
    %353 = vector.shape_cast %352 : vector<1x4x1xf32> to vector<4x1xf32>
    %354 = vector.broadcast %353 : vector<4x1xf32> to vector<4x256xf32>
    %355 = arith.mulf %317, %354 : vector<4x256xf32>
    %356 = arith.addf %351, %355 : vector<4x256xf32>
    %c3_163 = arith.constant 3 : index
    %c0_164 = arith.constant 0 : index
    %c0_165 = arith.constant 0 : index
    %357 = vector.load %arg3[%c3_163, %c0_164, %c0_165] : memref<36x4x1xf32, #tpu.memory_space<vmem>>, vector<1x4x1xf32>
    %358 = vector.shape_cast %357 : vector<1x4x1xf32> to vector<4x1xf32>
    %359 = vector.broadcast %358 : vector<4x1xf32> to vector<4x256xf32>
    %360 = arith.mulf %322, %359 : vector<4x256xf32>
    %361 = arith.addf %356, %360 : vector<4x256xf32>
    %c4_166 = arith.constant 4 : index
    %c0_167 = arith.constant 0 : index
    %c0_168 = arith.constant 0 : index
    %362 = vector.load %arg3[%c4_166, %c0_167, %c0_168] : memref<36x4x1xf32, #tpu.memory_space<vmem>>, vector<1x4x1xf32>
    %363 = vector.shape_cast %362 : vector<1x4x1xf32> to vector<4x1xf32>
    %364 = vector.broadcast %363 : vector<4x1xf32> to vector<4x256xf32>
    %365 = arith.mulf %302, %364 : vector<4x256xf32>
    %366 = arith.addf %361, %365 : vector<4x256xf32>
    %c5_169 = arith.constant 5 : index
    %c0_170 = arith.constant 0 : index
    %c0_171 = arith.constant 0 : index
    %367 = vector.load %arg3[%c5_169, %c0_170, %c0_171] : memref<36x4x1xf32, #tpu.memory_space<vmem>>, vector<1x4x1xf32>
    %368 = vector.shape_cast %367 : vector<1x4x1xf32> to vector<4x1xf32>
    %369 = vector.broadcast %368 : vector<4x1xf32> to vector<4x256xf32>
    %370 = arith.mulf %327, %369 : vector<4x256xf32>
    %371 = arith.addf %366, %370 : vector<4x256xf32>
    %c6_172 = arith.constant 6 : index
    %c0_173 = arith.constant 0 : index
    %c0_174 = arith.constant 0 : index
    %372 = vector.load %arg3[%c6_172, %c0_173, %c0_174] : memref<36x4x1xf32, #tpu.memory_space<vmem>>, vector<1x4x1xf32>
    %373 = vector.shape_cast %372 : vector<1x4x1xf32> to vector<4x1xf32>
    %374 = vector.broadcast %373 : vector<4x1xf32> to vector<4x256xf32>
    %375 = arith.mulf %332, %374 : vector<4x256xf32>
    %376 = arith.addf %371, %375 : vector<4x256xf32>
    %c7_175 = arith.constant 7 : index
    %c0_176 = arith.constant 0 : index
    %c0_177 = arith.constant 0 : index
    %377 = vector.load %arg3[%c7_175, %c0_176, %c0_177] : memref<36x4x1xf32, #tpu.memory_space<vmem>>, vector<1x4x1xf32>
    %378 = vector.shape_cast %377 : vector<1x4x1xf32> to vector<4x1xf32>
    %379 = vector.broadcast %378 : vector<4x1xf32> to vector<4x256xf32>
    %380 = arith.mulf %337, %379 : vector<4x256xf32>
    %381 = arith.addf %376, %380 : vector<4x256xf32>
    %c8_178 = arith.constant 8 : index
    %c0_179 = arith.constant 0 : index
    %c0_180 = arith.constant 0 : index
    %382 = vector.load %arg3[%c8_178, %c0_179, %c0_180] : memref<36x4x1xf32, #tpu.memory_space<vmem>>, vector<1x4x1xf32>
    %383 = vector.shape_cast %382 : vector<1x4x1xf32> to vector<4x1xf32>
    %384 = vector.broadcast %383 : vector<4x1xf32> to vector<4x256xf32>
    %385 = arith.mulf %342, %384 : vector<4x256xf32>
    %386 = arith.addf %381, %385 : vector<4x256xf32>
    %cst_181 = arith.constant dense<0.000000e+00> : vector<256xf32>
    %387 = vector.multi_reduction <add>, %386, %cst_181 [0] : vector<4x256xf32> to vector<256xf32>
    %388 = vector.shape_cast %387 : vector<256xf32> to vector<1x256xf32>
    %389 = vector.shape_cast %388 : vector<1x256xf32> to vector<1x1x256xf32>
    %cst_182 = arith.constant dense<0.000000e+00> : vector<1xf32>
    %390 = vector.multi_reduction <add>, %389, %cst_182 [1, 2] : vector<1x1x256xf32> to vector<1xf32>
    %391 = vector.shape_cast %390 : vector<1xf32> to vector<1x1x1xf32>
    %392 = vector.extract %391[0, 0, 0] : f32 from vector<1x1x1xf32>
    %393 = arith.mulf %388, %388 : vector<1x256xf32>
    %394 = vector.shape_cast %393 : vector<1x256xf32> to vector<1x1x256xf32>
    %cst_183 = arith.constant dense<0.000000e+00> : vector<1xf32>
    %395 = vector.multi_reduction <add>, %394, %cst_183 [1, 2] : vector<1x1x256xf32> to vector<1xf32>
    %396 = vector.shape_cast %395 : vector<1xf32> to vector<1x1x1xf32>
    %397 = vector.extract %396[0, 0, 0] : f32 from vector<1x1x1xf32>
    %cst_184 = arith.constant 3.906250e-03 : f32
    %398 = arith.mulf %392, %cst_184 : f32
    %cst_185 = arith.constant 3.906250e-03 : f32
    %399 = arith.mulf %397, %cst_185 : f32
    %400 = arith.mulf %398, %398 : f32
    %401 = arith.subf %399, %400 : f32
    %402 = vector.broadcast %398 : f32 to vector<1x256xf32>
    %403 = arith.subf %388, %402 : vector<1x256xf32>
    %cst_186 = arith.constant 9.99999974E-6 : f32
    %404 = arith.addf %401, %cst_186 : f32
    %405 = math.rsqrt %404 : f32
    %406 = vector.broadcast %405 : f32 to vector<1x256xf32>
    %407 = arith.mulf %403, %406 : vector<1x256xf32>
    %c9_187 = arith.constant 9 : index
    %c0_188 = arith.constant 0 : index
    %c0_189 = arith.constant 0 : index
    %408 = vector.load %arg3[%c9_187, %c0_188, %c0_189] : memref<36x4x1xf32, #tpu.memory_space<vmem>>, vector<1x4x1xf32>
    %409 = vector.shape_cast %408 : vector<1x4x1xf32> to vector<4x1xf32>
    %410 = vector.broadcast %409 : vector<4x1xf32> to vector<4x256xf32>
    %411 = arith.mulf %307, %410 : vector<4x256xf32>
    %c10_190 = arith.constant 10 : index
    %c0_191 = arith.constant 0 : index
    %c0_192 = arith.constant 0 : index
    %412 = vector.load %arg3[%c10_190, %c0_191, %c0_192] : memref<36x4x1xf32, #tpu.memory_space<vmem>>, vector<1x4x1xf32>
    %413 = vector.shape_cast %412 : vector<1x4x1xf32> to vector<4x1xf32>
    %414 = vector.broadcast %413 : vector<4x1xf32> to vector<4x256xf32>
    %415 = arith.mulf %312, %414 : vector<4x256xf32>
    %416 = arith.addf %411, %415 : vector<4x256xf32>
    %c11_193 = arith.constant 11 : index
    %c0_194 = arith.constant 0 : index
    %c0_195 = arith.constant 0 : index
    %417 = vector.load %arg3[%c11_193, %c0_194, %c0_195] : memref<36x4x1xf32, #tpu.memory_space<vmem>>, vector<1x4x1xf32>
    %418 = vector.shape_cast %417 : vector<1x4x1xf32> to vector<4x1xf32>
    %419 = vector.broadcast %418 : vector<4x1xf32> to vector<4x256xf32>
    %420 = arith.mulf %317, %419 : vector<4x256xf32>
    %421 = arith.addf %416, %420 : vector<4x256xf32>
    %c12_196 = arith.constant 12 : index
    %c0_197 = arith.constant 0 : index
    %c0_198 = arith.constant 0 : index
    %422 = vector.load %arg3[%c12_196, %c0_197, %c0_198] : memref<36x4x1xf32, #tpu.memory_space<vmem>>, vector<1x4x1xf32>
    %423 = vector.shape_cast %422 : vector<1x4x1xf32> to vector<4x1xf32>
    %424 = vector.broadcast %423 : vector<4x1xf32> to vector<4x256xf32>
    %425 = arith.mulf %322, %424 : vector<4x256xf32>
    %426 = arith.addf %421, %425 : vector<4x256xf32>
    %c13_199 = arith.constant 13 : index
    %c0_200 = arith.constant 0 : index
    %c0_201 = arith.constant 0 : index
    %427 = vector.load %arg3[%c13_199, %c0_200, %c0_201] : memref<36x4x1xf32, #tpu.memory_space<vmem>>, vector<1x4x1xf32>
    %428 = vector.shape_cast %427 : vector<1x4x1xf32> to vector<4x1xf32>
    %429 = vector.broadcast %428 : vector<4x1xf32> to vector<4x256xf32>
    %430 = arith.mulf %302, %429 : vector<4x256xf32>
    %431 = arith.addf %426, %430 : vector<4x256xf32>
    %c14_202 = arith.constant 14 : index
    %c0_203 = arith.constant 0 : index
    %c0_204 = arith.constant 0 : index
    %432 = vector.load %arg3[%c14_202, %c0_203, %c0_204] : memref<36x4x1xf32, #tpu.memory_space<vmem>>, vector<1x4x1xf32>
    %433 = vector.shape_cast %432 : vector<1x4x1xf32> to vector<4x1xf32>
    %434 = vector.broadcast %433 : vector<4x1xf32> to vector<4x256xf32>
    %435 = arith.mulf %327, %434 : vector<4x256xf32>
    %436 = arith.addf %431, %435 : vector<4x256xf32>
    %c15_205 = arith.constant 15 : index
    %c0_206 = arith.constant 0 : index
    %c0_207 = arith.constant 0 : index
    %437 = vector.load %arg3[%c15_205, %c0_206, %c0_207] : memref<36x4x1xf32, #tpu.memory_space<vmem>>, vector<1x4x1xf32>
    %438 = vector.shape_cast %437 : vector<1x4x1xf32> to vector<4x1xf32>
    %439 = vector.broadcast %438 : vector<4x1xf32> to vector<4x256xf32>
    %440 = arith.mulf %332, %439 : vector<4x256xf32>
    %441 = arith.addf %436, %440 : vector<4x256xf32>
    %c16_208 = arith.constant 16 : index
    %c0_209 = arith.constant 0 : index
    %c0_210 = arith.constant 0 : index
    %442 = vector.load %arg3[%c16_208, %c0_209, %c0_210] : memref<36x4x1xf32, #tpu.memory_space<vmem>>, vector<1x4x1xf32>
    %443 = vector.shape_cast %442 : vector<1x4x1xf32> to vector<4x1xf32>
    %444 = vector.broadcast %443 : vector<4x1xf32> to vector<4x256xf32>
    %445 = arith.mulf %337, %444 : vector<4x256xf32>
    %446 = arith.addf %441, %445 : vector<4x256xf32>
    %c17_211 = arith.constant 17 : index
    %c0_212 = arith.constant 0 : index
    %c0_213 = arith.constant 0 : index
    %447 = vector.load %arg3[%c17_211, %c0_212, %c0_213] : memref<36x4x1xf32, #tpu.memory_space<vmem>>, vector<1x4x1xf32>
    %448 = vector.shape_cast %447 : vector<1x4x1xf32> to vector<4x1xf32>
    %449 = vector.broadcast %448 : vector<4x1xf32> to vector<4x256xf32>
    %450 = arith.mulf %342, %449 : vector<4x256xf32>
    %451 = arith.addf %446, %450 : vector<4x256xf32>
    %cst_214 = arith.constant dense<0.000000e+00> : vector<256xf32>
    %452 = vector.multi_reduction <add>, %451, %cst_214 [0] : vector<4x256xf32> to vector<256xf32>
    %453 = vector.shape_cast %452 : vector<256xf32> to vector<1x256xf32>
    %454 = vector.shape_cast %453 : vector<1x256xf32> to vector<1x1x256xf32>
    %cst_215 = arith.constant dense<0.000000e+00> : vector<1xf32>
    %455 = vector.multi_reduction <add>, %454, %cst_215 [1, 2] : vector<1x1x256xf32> to vector<1xf32>
    %456 = vector.shape_cast %455 : vector<1xf32> to vector<1x1x1xf32>
    %457 = vector.extract %456[0, 0, 0] : f32 from vector<1x1x1xf32>
    %458 = arith.mulf %453, %453 : vector<1x256xf32>
    %459 = vector.shape_cast %458 : vector<1x256xf32> to vector<1x1x256xf32>
    %cst_216 = arith.constant dense<0.000000e+00> : vector<1xf32>
    %460 = vector.multi_reduction <add>, %459, %cst_216 [1, 2] : vector<1x1x256xf32> to vector<1xf32>
    %461 = vector.shape_cast %460 : vector<1xf32> to vector<1x1x1xf32>
    %462 = vector.extract %461[0, 0, 0] : f32 from vector<1x1x1xf32>
    %cst_217 = arith.constant 3.906250e-03 : f32
    %463 = arith.mulf %457, %cst_217 : f32
    %cst_218 = arith.constant 3.906250e-03 : f32
    %464 = arith.mulf %462, %cst_218 : f32
    %465 = arith.mulf %463, %463 : f32
    %466 = arith.subf %464, %465 : f32
    %467 = vector.broadcast %463 : f32 to vector<1x256xf32>
    %468 = arith.subf %453, %467 : vector<1x256xf32>
    %cst_219 = arith.constant 9.99999974E-6 : f32
    %469 = arith.addf %466, %cst_219 : f32
    %470 = math.rsqrt %469 : f32
    %471 = vector.broadcast %470 : f32 to vector<1x256xf32>
    %472 = arith.mulf %468, %471 : vector<1x256xf32>
    %c18_220 = arith.constant 18 : index
    %c0_221 = arith.constant 0 : index
    %c0_222 = arith.constant 0 : index
    %473 = vector.load %arg3[%c18_220, %c0_221, %c0_222] : memref<36x4x1xf32, #tpu.memory_space<vmem>>, vector<1x4x1xf32>
    %474 = vector.shape_cast %473 : vector<1x4x1xf32> to vector<4x1xf32>
    %475 = vector.broadcast %474 : vector<4x1xf32> to vector<4x256xf32>
    %476 = arith.mulf %307, %475 : vector<4x256xf32>
    %c19_223 = arith.constant 19 : index
    %c0_224 = arith.constant 0 : index
    %c0_225 = arith.constant 0 : index
    %477 = vector.load %arg3[%c19_223, %c0_224, %c0_225] : memref<36x4x1xf32, #tpu.memory_space<vmem>>, vector<1x4x1xf32>
    %478 = vector.shape_cast %477 : vector<1x4x1xf32> to vector<4x1xf32>
    %479 = vector.broadcast %478 : vector<4x1xf32> to vector<4x256xf32>
    %480 = arith.mulf %312, %479 : vector<4x256xf32>
    %481 = arith.addf %476, %480 : vector<4x256xf32>
    %c20_226 = arith.constant 20 : index
    %c0_227 = arith.constant 0 : index
    %c0_228 = arith.constant 0 : index
    %482 = vector.load %arg3[%c20_226, %c0_227, %c0_228] : memref<36x4x1xf32, #tpu.memory_space<vmem>>, vector<1x4x1xf32>
    %483 = vector.shape_cast %482 : vector<1x4x1xf32> to vector<4x1xf32>
    %484 = vector.broadcast %483 : vector<4x1xf32> to vector<4x256xf32>
    %485 = arith.mulf %317, %484 : vector<4x256xf32>
    %486 = arith.addf %481, %485 : vector<4x256xf32>
    %c21_229 = arith.constant 21 : index
    %c0_230 = arith.constant 0 : index
    %c0_231 = arith.constant 0 : index
    %487 = vector.load %arg3[%c21_229, %c0_230, %c0_231] : memref<36x4x1xf32, #tpu.memory_space<vmem>>, vector<1x4x1xf32>
    %488 = vector.shape_cast %487 : vector<1x4x1xf32> to vector<4x1xf32>
    %489 = vector.broadcast %488 : vector<4x1xf32> to vector<4x256xf32>
    %490 = arith.mulf %322, %489 : vector<4x256xf32>
    %491 = arith.addf %486, %490 : vector<4x256xf32>
    %c22_232 = arith.constant 22 : index
    %c0_233 = arith.constant 0 : index
    %c0_234 = arith.constant 0 : index
    %492 = vector.load %arg3[%c22_232, %c0_233, %c0_234] : memref<36x4x1xf32, #tpu.memory_space<vmem>>, vector<1x4x1xf32>
    %493 = vector.shape_cast %492 : vector<1x4x1xf32> to vector<4x1xf32>
    %494 = vector.broadcast %493 : vector<4x1xf32> to vector<4x256xf32>
    %495 = arith.mulf %302, %494 : vector<4x256xf32>
    %496 = arith.addf %491, %495 : vector<4x256xf32>
    %c23_235 = arith.constant 23 : index
    %c0_236 = arith.constant 0 : index
    %c0_237 = arith.constant 0 : index
    %497 = vector.load %arg3[%c23_235, %c0_236, %c0_237] : memref<36x4x1xf32, #tpu.memory_space<vmem>>, vector<1x4x1xf32>
    %498 = vector.shape_cast %497 : vector<1x4x1xf32> to vector<4x1xf32>
    %499 = vector.broadcast %498 : vector<4x1xf32> to vector<4x256xf32>
    %500 = arith.mulf %327, %499 : vector<4x256xf32>
    %501 = arith.addf %496, %500 : vector<4x256xf32>
    %c24_238 = arith.constant 24 : index
    %c0_239 = arith.constant 0 : index
    %c0_240 = arith.constant 0 : index
    %502 = vector.load %arg3[%c24_238, %c0_239, %c0_240] : memref<36x4x1xf32, #tpu.memory_space<vmem>>, vector<1x4x1xf32>
    %503 = vector.shape_cast %502 : vector<1x4x1xf32> to vector<4x1xf32>
    %504 = vector.broadcast %503 : vector<4x1xf32> to vector<4x256xf32>
    %505 = arith.mulf %332, %504 : vector<4x256xf32>
    %506 = arith.addf %501, %505 : vector<4x256xf32>
    %c25_241 = arith.constant 25 : index
    %c0_242 = arith.constant 0 : index
    %c0_243 = arith.constant 0 : index
    %507 = vector.load %arg3[%c25_241, %c0_242, %c0_243] : memref<36x4x1xf32, #tpu.memory_space<vmem>>, vector<1x4x1xf32>
    %508 = vector.shape_cast %507 : vector<1x4x1xf32> to vector<4x1xf32>
    %509 = vector.broadcast %508 : vector<4x1xf32> to vector<4x256xf32>
    %510 = arith.mulf %337, %509 : vector<4x256xf32>
    %511 = arith.addf %506, %510 : vector<4x256xf32>
    %c26_244 = arith.constant 26 : index
    %c0_245 = arith.constant 0 : index
    %c0_246 = arith.constant 0 : index
    %512 = vector.load %arg3[%c26_244, %c0_245, %c0_246] : memref<36x4x1xf32, #tpu.memory_space<vmem>>, vector<1x4x1xf32>
    %513 = vector.shape_cast %512 : vector<1x4x1xf32> to vector<4x1xf32>
    %514 = vector.broadcast %513 : vector<4x1xf32> to vector<4x256xf32>
    %515 = arith.mulf %342, %514 : vector<4x256xf32>
    %516 = arith.addf %511, %515 : vector<4x256xf32>
    %cst_247 = arith.constant dense<0.000000e+00> : vector<256xf32>
    %517 = vector.multi_reduction <add>, %516, %cst_247 [0] : vector<4x256xf32> to vector<256xf32>
    %518 = vector.shape_cast %517 : vector<256xf32> to vector<1x256xf32>
    %519 = vector.shape_cast %518 : vector<1x256xf32> to vector<1x1x256xf32>
    %cst_248 = arith.constant dense<0.000000e+00> : vector<1xf32>
    %520 = vector.multi_reduction <add>, %519, %cst_248 [1, 2] : vector<1x1x256xf32> to vector<1xf32>
    %521 = vector.shape_cast %520 : vector<1xf32> to vector<1x1x1xf32>
    %522 = vector.extract %521[0, 0, 0] : f32 from vector<1x1x1xf32>
    %523 = arith.mulf %518, %518 : vector<1x256xf32>
    %524 = vector.shape_cast %523 : vector<1x256xf32> to vector<1x1x256xf32>
    %cst_249 = arith.constant dense<0.000000e+00> : vector<1xf32>
    %525 = vector.multi_reduction <add>, %524, %cst_249 [1, 2] : vector<1x1x256xf32> to vector<1xf32>
    %526 = vector.shape_cast %525 : vector<1xf32> to vector<1x1x1xf32>
    %527 = vector.extract %526[0, 0, 0] : f32 from vector<1x1x1xf32>
    %cst_250 = arith.constant 3.906250e-03 : f32
    %528 = arith.mulf %522, %cst_250 : f32
    %cst_251 = arith.constant 3.906250e-03 : f32
    %529 = arith.mulf %527, %cst_251 : f32
    %530 = arith.mulf %528, %528 : f32
    %531 = arith.subf %529, %530 : f32
    %532 = vector.broadcast %528 : f32 to vector<1x256xf32>
    %533 = arith.subf %518, %532 : vector<1x256xf32>
    %cst_252 = arith.constant 9.99999974E-6 : f32
    %534 = arith.addf %531, %cst_252 : f32
    %535 = math.rsqrt %534 : f32
    %536 = vector.broadcast %535 : f32 to vector<1x256xf32>
    %537 = arith.mulf %533, %536 : vector<1x256xf32>
    %c27_253 = arith.constant 27 : index
    %c0_254 = arith.constant 0 : index
    %c0_255 = arith.constant 0 : index
    %538 = vector.load %arg3[%c27_253, %c0_254, %c0_255] : memref<36x4x1xf32, #tpu.memory_space<vmem>>, vector<1x4x1xf32>
    %539 = vector.shape_cast %538 : vector<1x4x1xf32> to vector<4x1xf32>
    %540 = vector.broadcast %539 : vector<4x1xf32> to vector<4x256xf32>
    %541 = arith.mulf %307, %540 : vector<4x256xf32>
    %c28_256 = arith.constant 28 : index
    %c0_257 = arith.constant 0 : index
    %c0_258 = arith.constant 0 : index
    %542 = vector.load %arg3[%c28_256, %c0_257, %c0_258] : memref<36x4x1xf32, #tpu.memory_space<vmem>>, vector<1x4x1xf32>
    %543 = vector.shape_cast %542 : vector<1x4x1xf32> to vector<4x1xf32>
    %544 = vector.broadcast %543 : vector<4x1xf32> to vector<4x256xf32>
    %545 = arith.mulf %312, %544 : vector<4x256xf32>
    %546 = arith.addf %541, %545 : vector<4x256xf32>
    %c29_259 = arith.constant 29 : index
    %c0_260 = arith.constant 0 : index
    %c0_261 = arith.constant 0 : index
    %547 = vector.load %arg3[%c29_259, %c0_260, %c0_261] : memref<36x4x1xf32, #tpu.memory_space<vmem>>, vector<1x4x1xf32>
    %548 = vector.shape_cast %547 : vector<1x4x1xf32> to vector<4x1xf32>
    %549 = vector.broadcast %548 : vector<4x1xf32> to vector<4x256xf32>
    %550 = arith.mulf %317, %549 : vector<4x256xf32>
    %551 = arith.addf %546, %550 : vector<4x256xf32>
    %c30_262 = arith.constant 30 : index
    %c0_263 = arith.constant 0 : index
    %c0_264 = arith.constant 0 : index
    %552 = vector.load %arg3[%c30_262, %c0_263, %c0_264] : memref<36x4x1xf32, #tpu.memory_space<vmem>>, vector<1x4x1xf32>
    %553 = vector.shape_cast %552 : vector<1x4x1xf32> to vector<4x1xf32>
    %554 = vector.broadcast %553 : vector<4x1xf32> to vector<4x256xf32>
    %555 = arith.mulf %322, %554 : vector<4x256xf32>
    %556 = arith.addf %551, %555 : vector<4x256xf32>
    %c31_265 = arith.constant 31 : index
    %c0_266 = arith.constant 0 : index
    %c0_267 = arith.constant 0 : index
    %557 = vector.load %arg3[%c31_265, %c0_266, %c0_267] : memref<36x4x1xf32, #tpu.memory_space<vmem>>, vector<1x4x1xf32>
    %558 = vector.shape_cast %557 : vector<1x4x1xf32> to vector<4x1xf32>
    %559 = vector.broadcast %558 : vector<4x1xf32> to vector<4x256xf32>
    %560 = arith.mulf %302, %559 : vector<4x256xf32>
    %561 = arith.addf %556, %560 : vector<4x256xf32>
    %c32_268 = arith.constant 32 : index
    %c0_269 = arith.constant 0 : index
    %c0_270 = arith.constant 0 : index
    %562 = vector.load %arg3[%c32_268, %c0_269, %c0_270] : memref<36x4x1xf32, #tpu.memory_space<vmem>>, vector<1x4x1xf32>
    %563 = vector.shape_cast %562 : vector<1x4x1xf32> to vector<4x1xf32>
    %564 = vector.broadcast %563 : vector<4x1xf32> to vector<4x256xf32>
    %565 = arith.mulf %327, %564 : vector<4x256xf32>
    %566 = arith.addf %561, %565 : vector<4x256xf32>
    %c33_271 = arith.constant 33 : index
    %c0_272 = arith.constant 0 : index
    %c0_273 = arith.constant 0 : index
    %567 = vector.load %arg3[%c33_271, %c0_272, %c0_273] : memref<36x4x1xf32, #tpu.memory_space<vmem>>, vector<1x4x1xf32>
    %568 = vector.shape_cast %567 : vector<1x4x1xf32> to vector<4x1xf32>
    %569 = vector.broadcast %568 : vector<4x1xf32> to vector<4x256xf32>
    %570 = arith.mulf %332, %569 : vector<4x256xf32>
    %571 = arith.addf %566, %570 : vector<4x256xf32>
    %c34_274 = arith.constant 34 : index
    %c0_275 = arith.constant 0 : index
    %c0_276 = arith.constant 0 : index
    %572 = vector.load %arg3[%c34_274, %c0_275, %c0_276] : memref<36x4x1xf32, #tpu.memory_space<vmem>>, vector<1x4x1xf32>
    %573 = vector.shape_cast %572 : vector<1x4x1xf32> to vector<4x1xf32>
    %574 = vector.broadcast %573 : vector<4x1xf32> to vector<4x256xf32>
    %575 = arith.mulf %337, %574 : vector<4x256xf32>
    %576 = arith.addf %571, %575 : vector<4x256xf32>
    %c35_277 = arith.constant 35 : index
    %c0_278 = arith.constant 0 : index
    %c0_279 = arith.constant 0 : index
    %577 = vector.load %arg3[%c35_277, %c0_278, %c0_279] : memref<36x4x1xf32, #tpu.memory_space<vmem>>, vector<1x4x1xf32>
    %578 = vector.shape_cast %577 : vector<1x4x1xf32> to vector<4x1xf32>
    %579 = vector.broadcast %578 : vector<4x1xf32> to vector<4x256xf32>
    %580 = arith.mulf %342, %579 : vector<4x256xf32>
    %581 = arith.addf %576, %580 : vector<4x256xf32>
    %cst_280 = arith.constant dense<0.000000e+00> : vector<256xf32>
    %582 = vector.multi_reduction <add>, %581, %cst_280 [0] : vector<4x256xf32> to vector<256xf32>
    %583 = vector.shape_cast %582 : vector<256xf32> to vector<1x256xf32>
    %584 = vector.shape_cast %583 : vector<1x256xf32> to vector<1x1x256xf32>
    %cst_281 = arith.constant dense<0.000000e+00> : vector<1xf32>
    %585 = vector.multi_reduction <add>, %584, %cst_281 [1, 2] : vector<1x1x256xf32> to vector<1xf32>
    %586 = vector.shape_cast %585 : vector<1xf32> to vector<1x1x1xf32>
    %587 = vector.extract %586[0, 0, 0] : f32 from vector<1x1x1xf32>
    %588 = arith.mulf %583, %583 : vector<1x256xf32>
    %589 = vector.shape_cast %588 : vector<1x256xf32> to vector<1x1x256xf32>
    %cst_282 = arith.constant dense<0.000000e+00> : vector<1xf32>
    %590 = vector.multi_reduction <add>, %589, %cst_282 [1, 2] : vector<1x1x256xf32> to vector<1xf32>
    %591 = vector.shape_cast %590 : vector<1xf32> to vector<1x1x1xf32>
    %592 = vector.extract %591[0, 0, 0] : f32 from vector<1x1x1xf32>
    %cst_283 = arith.constant 3.906250e-03 : f32
    %593 = arith.mulf %587, %cst_283 : f32
    %cst_284 = arith.constant 3.906250e-03 : f32
    %594 = arith.mulf %592, %cst_284 : f32
    %595 = arith.mulf %593, %593 : f32
    %596 = arith.subf %594, %595 : f32
    %597 = vector.broadcast %593 : f32 to vector<1x256xf32>
    %598 = arith.subf %583, %597 : vector<1x256xf32>
    %cst_285 = arith.constant 9.99999974E-6 : f32
    %599 = arith.addf %596, %cst_285 : f32
    %600 = math.rsqrt %599 : f32
    %601 = vector.broadcast %600 : f32 to vector<1x256xf32>
    %602 = arith.mulf %598, %601 : vector<1x256xf32>
    %603 = tpu.concatenate %407, %472, %537, %602 in 0 : vector<1x256xf32>, vector<1x256xf32>, vector<1x256xf32>, vector<1x256xf32> -> vector<4x256xf32>
    %604 = arith.addf %603, %1 : vector<4x256xf32>
    %c0_286 = arith.constant 0 : index
    %c0_287 = arith.constant 0 : index
    %c0_288 = arith.constant 0 : index
    %605 = vector.load %arg5[%c0_286, %c0_287, %c0_288] : memref<1x4x256xf32, #tpu.memory_space<vmem>>, vector<1x4x256xf32>
    %606 = vector.shape_cast %605 : vector<1x4x256xf32> to vector<4x256xf32>
    %607 = vector.shape_cast %604 : vector<4x256xf32> to vector<1x4x256xf32>
    tpu.vector_store %arg5[%c0_286, %c0_287, %c0_288], %607 {strides = array<i32>} : memref<1x4x256xf32, #tpu.memory_space<vmem>>, vector<1x4x256xf32>,
    return
  }
  func.func @transform_0(%arg0: i32) -> (i32, i32, i32) {
    %c0_i32 = arith.constant 0 : i32
    %c0_i32_0 = arith.constant 0 : i32
    %c0_i32_1 = arith.constant 0 : i32
    return %arg0, %c0_i32, %c0_i32_0 : i32, i32, i32
  }
  func.func @transform_1(%arg0: i32) -> (i32, i32, i32) {
    %c0_i32 = arith.constant 0 : i32
    %c0_i32_0 = arith.constant 0 : i32
    %c0_i32_1 = arith.constant 0 : i32
    %c0_i32_2 = arith.constant 0 : i32
    return %c0_i32, %c0_i32_0, %c0_i32_1 : i32, i32, i32
  }
  func.func @transform_2(%arg0: i32) -> (i32, i32, i32) {
    %c0_i32 = arith.constant 0 : i32
    %c0_i32_0 = arith.constant 0 : i32
    %c0_i32_1 = arith.constant 0 : i32
    %c0_i32_2 = arith.constant 0 : i32
    return %c0_i32, %c0_i32_0, %c0_i32_1 : i32, i32, i32
  }
  func.func @transform_3(%arg0: i32) -> (i32, i32, i32) {
    %c0_i32 = arith.constant 0 : i32
    %c0_i32_0 = arith.constant 0 : i32
    %c0_i32_1 = arith.constant 0 : i32
    %c0_i32_2 = arith.constant 0 : i32
    return %c0_i32, %c0_i32_0, %c0_i32_1 : i32, i32, i32
  }
  func.func @transform_4(%arg0: i32) -> (i32, i32, i32) {
    %c0_i32 = arith.constant 0 : i32
    %c0_i32_0 = arith.constant 0 : i32
    %c0_i32_1 = arith.constant 0 : i32
    return %arg0, %c0_i32, %c0_i32_0 : i32, i32, i32
  }
}

</mosaic_0001>

<llo_original>
// kernel: tpu_custom_call.1
$region0: #{tpu_custom_call.1}
  #allocation0 [shape = 'u32[]', space=smem, size = 0x4, offset = 0x4, fixed_abs, tag = 'smem constant byte address 0x4 - core index']
  #allocation1 [shape = 'u32[144,128]{1,0:T(1,128)}', space=vmem, size = 0x12000, scoped, tag = 'internal scratch']
  %s0 = inlined_call_operand.vmem [shape: f32[2,4,256], index: 0, kind: input, shape index: {}]
  %s1 = inlined_call_operand.vmem [shape: f32[36,4,1], index: 1, kind: input, shape index: {}]
  %s2 = inlined_call_operand.vmem [shape: f32[36,4,1], index: 2, kind: input, shape index: {}]
  %s3 = inlined_call_operand.vmem [shape: f32[9,1,256], index: 3, kind: input, shape index: {}]
  %s4 = inlined_call_operand.hbm [shape: f32[2,4,256], index: 4, kind: output, shape index: {}]
  %s5 = sld [smem:[#allocation0]]
  $region49: #{tpu_custom_call.1} parent=0
    _
  %s7 = ssub.s32 1, %s5
  %s8 = scalar_select 0, %s7, %s5
  $region1: #{tpu_custom_call.1} parent=0
    #allocation2 [shape = 'u8[8192]{0}', space=vmem, size = 0x2000, scoped, tag = 'output window, operand 0']
    #allocation3 [shape = 's32[2]{0}', space=sflag, size = 0x8, scoped, tag = 'scoped memory for tpu_custom_call.1']
    %9 = vsyncpa [#allocation3], 0
    %s10 = scalar_lea.sflag [#allocation3], 1
    %11 = vsyncpa %s10, 0
    loop: start=0, step=1, limit=4
    $region2: #{tpu_custom_call.1} parent=1 // loop_pre_header
      _
    $region3: #{tpu_custom_call.1} parent=1 // loop_header
      %s13 = sphi 0, %s17
      %p14 = scmp.ge.s32.totalorder %s13, 4
      %s23 = sphi 0, %s25
      %s26 = sphi 0, %s23
      %s27 = sphi 0, %s26
      %s43 = sphi 0, %s27
      %s47 = sphi 0, %s47
      %s49 = sphi 0, %s47
      %s50 = sphi 0, %s49
      %s64 = sphi 0, %s50
      %s68 = sphi 0, %s68
      %s70 = sphi 0, %s68
      %s71 = sphi 0, %s70
      %s85 = sphi 0, %s71
      %s89 = sphi 0, %s89
      %s91 = sphi 0, %s89
      %s92 = sphi 0, %s91
      %s106 = sphi 0, %s92
      %s112 = sphi 0, %s114
      %s115 = sphi 0, %s112
      %s116 = sphi 0, %s115
      %s132 = sphi 0, %s116
    $region4: #{tpu_custom_call.1} parent=1 // loop_header_branch
      %16 = sbr.rel (%p14) target = $region8
    $region5: #{tpu_custom_call.1} parent=1 // loop_body
      %s18 = ssub.s32 %s13, 1
      %s19 = ssub.s32 %s13, 2
      %s20 = sadd.s32 %s13, 1
      %s21 = ssub.s32 %s13, %s20
      %p22 = scmp.eq.s32.totalorder %s21, 0
      %s24 = sadd.s32 %s23, 1
      %s25 = scalar_select %p22, %s23, %s24
      %p28 = pneg %p22
      %p29 = scmp.eq.s32.totalorder %s13, 1
      %p30 = por %p28, %p29
      %p31 = scmp.ne.s32.totalorder %s23, %s26
      %p32 = scmp.eq.s32.totalorder %s13, 0
      %p33 = por %p31, %p32
      %p34 = scmp.ne.s32.totalorder %s23, %s26
      %p35 = scmp.eq.s32.totalorder %s18, 1
      %p36 = por %p34, %p35
      %p37 = scmp.ne.s32.totalorder %s26, %s27
      %p38 = scmp.eq.s32.totalorder %s18, 0
      %p39 = por %p37, %p38
      %p40 = scmp.ne.s32.totalorder %s26, %s27
      %p41 = scmp.eq.s32.totalorder %s19, 1
      %p42 = por %p40, %p41
      %p44 = scmp.ne.s32.totalorder %s27, %s43
      %p45 = scmp.eq.s32.totalorder %s19, 0
      %p46 = por %p44, %p45
      %s48 = sadd.s32 %s47, 1
      %p51 = scmp.eq.s32.totalorder %s13, 1
      %p52 = scmp.ne.s32.totalorder %s47, %s49
      %p53 = scmp.eq.s32.totalorder %s13, 0
      %p54 = por %p52, %p53
      %p55 = scmp.ne.s32.totalorder %s47, %s49
      %p56 = scmp.eq.s32.totalorder %s18, 1
      %p57 = por %p55, %p56
      %p58 = scmp.ne.s32.totalorder %s49, %s50
      %p59 = scmp.eq.s32.totalorder %s18, 0
      %p60 = por %p58, %p59
      %p61 = scmp.ne.s32.totalorder %s49, %s50
      %p62 = scmp.eq.s32.totalorder %s19, 1
      %p63 = por %p61, %p62
      %p65 = scmp.ne.s32.totalorder %s50, %s64
      %p66 = scmp.eq.s32.totalorder %s19, 0
      %p67 = por %p65, %p66
      %s69 = sadd.s32 %s68, 1
      %p72 = scmp.eq.s32.totalorder %s13, 1
      %p73 = scmp.ne.s32.totalorder %s68, %s70
      %p74 = scmp.eq.s32.totalorder %s13, 0
      %p75 = por %p73, %p74
      %p76 = scmp.ne.s32.totalorder %s68, %s70
      %p77 = scmp.eq.s32.totalorder %s18, 1
      %p78 = por %p76, %p77
      %p79 = scmp.ne.s32.totalorder %s70, %s71
      %p80 = scmp.eq.s32.totalorder %s18, 0
      %p81 = por %p79, %p80
      %p82 = scmp.ne.s32.totalorder %s70, %s71
      %p83 = scmp.eq.s32.totalorder %s19, 1
      %p84 = por %p82, %p83
      %p86 = scmp.ne.s32.totalorder %s71, %s85
      %p87 = scmp.eq.s32.totalorder %s19, 0
      %p88 = por %p86, %p87
      %s90 = sadd.s32 %s89, 1
      %p93 = scmp.eq.s32.totalorder %s13, 1
      %p94 = scmp.ne.s32.totalorder %s89, %s91
      %p95 = scmp.eq.s32.totalorder %s13, 0
      %p96 = por %p94, %p95
      %p97 = scmp.ne.s32.totalorder %s89, %s91
      %p98 = scmp.eq.s32.totalorder %s18, 1
      %p99 = por %p97, %p98
      %p100 = scmp.ne.s32.totalorder %s91, %s92
      %p101 = scmp.eq.s32.totalorder %s18, 0
      %p102 = por %p100, %p101
      %p103 = scmp.ne.s32.totalorder %s91, %s92
      %p104 = scmp.eq.s32.totalorder %s19, 1
      %p105 = por %p103, %p104
      %p107 = scmp.ne.s32.totalorder %s92, %s106
      %p108 = scmp.eq.s32.totalorder %s19, 0
      %p109 = por %p107, %p108
      %s110 = ssub.s32 %s13, %s20
      %p111 = scmp.eq.s32.totalorder %s110, 0
      %s113 = sadd.s32 %s112, 1
      %s114 = scalar_select %p111, %s112, %s113
      %p117 = pneg %p111
      %p118 = scmp.eq.s32.totalorder %s13, 1
      %p119 = por %p117, %p118
      %p120 = scmp.ne.s32.totalorder %s112, %s115
      %p121 = scmp.eq.s32.totalorder %s13, 0
      %p122 = por %p120, %p121
      %p123 = scmp.ne.s32.totalorder %s112, %s115
      %p124 = scmp.eq.s32.totalorder %s18, 1
      %p125 = por %p123, %p124
      %p126 = scmp.ne.s32.totalorder %s115, %s116
      %p127 = scmp.eq.s32.totalorder %s18, 0
      %p128 = por %p126, %p127
      %p129 = scmp.ne.s32.totalorder %s115, %s116
      %p130 = scmp.eq.s32.totalorder %s19, 1
      %p131 = por %p129, %p130
      %p133 = scmp.ne.s32.totalorder %s116, %s132
      %p134 = scmp.eq.s32.totalorder %s19, 0
      %p135 = por %p133, %p134
      %p136 = scmp.le.s32.totalorder 1, %s13
      %p137 = scmp.lt.s32.totalorder %s13, 3
      %p138 = pnand %p136, %p137
      %p139 = pneg %p138
      // Predicated region
      $region9: #{tpu_custom_call.1} parent=5 // pred_check
        _
      $region10: #{tpu_custom_call.1} parent=5 // pred_check_branch
        %141 = sbr.rel (%p138) target = $region12
      $region11: #{tpu_custom_call.1} parent=5 // pred_region
        %s142 = ssub.s32 %s13, 1
        // Predicated region
        $region13: #{tpu_custom_call.1} parent=11 // pred_check
          %p143 = pneg %p60
        $region14: #{tpu_custom_call.1} parent=11 // pred_check_branch
          %145 = sbr.rel (%p143) target = $region16
        $region15: #{tpu_custom_call.1} parent=11 // pred_region
          _
        $region16: #{tpu_custom_call.1} parent=11 // pred_fallthru
          _
        // Predicated region
        $region17: #{tpu_custom_call.1} parent=11 // pred_check
          %p146 = pneg %p81
        $region18: #{tpu_custom_call.1} parent=11 // pred_check_branch
          %148 = sbr.rel (%p146) target = $region20
        $region19: #{tpu_custom_call.1} parent=11 // pred_region
          _
        $region20: #{tpu_custom_call.1} parent=11 // pred_fallthru
          _
        // Predicated region
        $region21: #{tpu_custom_call.1} parent=11 // pred_check
          %p149 = pneg %p102
        $region22: #{tpu_custom_call.1} parent=11 // pred_check_branch
          %151 = sbr.rel (%p149) target = $region24
        $region23: #{tpu_custom_call.1} parent=11 // pred_region
          _
        $region24: #{tpu_custom_call.1} parent=11 // pred_fallthru
          _
      $region12: #{tpu_custom_call.1} parent=5 // pred_fallthru
        _
      %p152 = scmp.lt.s32.totalorder %s13, 2
      // Predicated region
      $region25: #{tpu_custom_call.1} parent=5 // pred_check
        %p153 = pneg %p152
      $region26: #{tpu_custom_call.1} parent=5 // pred_check_branch
        %155 = sbr.rel (%p153) target = $region28
      $region27: #{tpu_custom_call.1} parent=5 // pred_region
        // Predicated region
        $region29: #{tpu_custom_call.1} parent=27 // pred_check
          %p156 = pneg %p33
        $region30: #{tpu_custom_call.1} parent=27 // pred_check_branch
          %158 = sbr.rel (%p156) target = $region32
        $region31: #{tpu_custom_call.1} parent=27 // pred_region
          %p159 = scmp.lt.s32.totalorder %s13, 1
          %s160 = scalar_select %p159, %s13, 1
          %s161 = smul.addr %s160, 2
          %s162 = smul.addr %s161, 4
          %s163 = scalar_lea.vmem %s0, %s162
        $region32: #{tpu_custom_call.1} parent=27 // pred_fallthru
          _
      $region28: #{tpu_custom_call.1} parent=5 // pred_fallthru
        _
      %p164 = scmp.le.s32.totalorder 1, %s13
      %p165 = scmp.lt.s32.totalorder %s13, 3
      %p166 = pnand %p164, %p165
      %p167 = pneg %p166
      // Predicated region
      $region33: #{tpu_custom_call.1} parent=5 // pred_check
        _
      $region34: #{tpu_custom_call.1} parent=5 // pred_check_branch
        %169 = sbr.rel (%p166) target = $region36
      $region35: #{tpu_custom_call.1} parent=5 // pred_region
        %s170 = ssub.s32 %s13, 1
        %p171 = scmp.lt.s32.totalorder %s18, 1
        %s172 = scalar_select %p171, %s18, 1
        %s173 = smul.addr %s172, 2
        %s174 = smul.addr %s173, 4
        %s175 = scalar_lea.vmem %s0, %s174
        %p176 = pneg %p39
        %p177 = pneg %p36
        %p178 = pneg %p60
        %p179 = pneg %p57
        %p180 = pneg %p81
        %p181 = pneg %p78
        %p182 = pneg %p102
        %p183 = pneg %p99
        %p184 = pneg %p128
        %p185 = pneg %p125
        %s186 = sand.u32 %s115, 1
        %s187 = scalar_lea.sflag [#allocation3], %s186
        %s188 = sand.u32 %s115, 1
        %s189 = smul.addr %s188, 8
        %s190 = scalar_lea.vmem [#allocation2], %s189
        %p191 = scmp.lt.s32.totalorder %s18, 1
        %s192 = scalar_select %p191, %s18, 1
        %s193 = smul.addr %s192, 2
        %s194 = smul.addr %s193, 4
        %s195 = scalar_lea.vmem %s0, %s194
        %v196 = vld [vmem:[%s195] sm:$0xff]
        %v198 = vcombine.high %v196, %v196
        %200 = vrot.lane.b32.xlu0 %v196, 17
        %v201 = vpop.permute.xlu0 %200
        %202 = vrot.lane.b32.xlu0 %v198, 17
        %v203 = vpop.permute.xlu0 %202
        %v204 = vlaneseq
        %v205 = vand.u32 %v204, 127
        %vm206 = vcmp.lt.s32.totalorder %v205, 17
        %v207 = vsel %vm206, %v201, %v203
        %v208 = vsel %vm206, %v203, %v201
        %v209 = vld [vmem:[%s3] sm:$0x3]
        %v211 = vlaneseq
        %v212 = vshrl.u32 %v211, 7
        %v213 = vsub.s32 0, %v212
        %v214 = vrot.slane %v209, %v213
        %v215 = vlaneseq
        %v216 = vshrl.u32 %v215, 7
        %v217 = vsub.s32 1, %v216
        %v218 = vrot.slane %v209, %v217
        %v221 = vmul.f32 %v208, %v214
        %v222 = vmul.f32 %v207, %v218
        %223 = vrot.lane.b32.xlu0 %v196, 16
        %v224 = vpop.permute.xlu0 %223
        %225 = vrot.lane.b32.xlu0 %v198, 16
        %v226 = vpop.permute.xlu0 %225
        %vm227 = vcmp.lt.s32.totalorder %v205, 16
        %v228 = vsel %vm227, %v224, %v226
        %v229 = vsel %vm227, %v226, %v224
        %s230 = scalar_lea.vmem %s3, 2
        %v231 = vld [vmem:[%s230] sm:$0x3]
        %v233 = vlaneseq
        %v234 = vshrl.u32 %v233, 7
        %v235 = vsub.s32 0, %v234
        %v236 = vrot.slane %v231, %v235
        %v237 = vlaneseq
        %v238 = vshrl.u32 %v237, 7
        %v239 = vsub.s32 1, %v238
        %v240 = vrot.slane %v231, %v239
        %v243 = vmul.f32 %v229, %v236
        %v244 = vmul.f32 %v228, %v240
        %245 = vrot.lane.b32.xlu0 %v196, 15
        %v246 = vpop.permute.xlu0 %245
        %247 = vrot.lane.b32.xlu0 %v198, 15
        %v248 = vpop.permute.xlu0 %247
        %vm249 = vcmp.lt.s32.totalorder %v205, 15
        %v250 = vsel %vm249, %v246, %v248
        %v251 = vsel %vm249, %v248, %v246
        %s252 = scalar_lea.vmem %s3, 4
        %v253 = vld [vmem:[%s252] sm:$0x3]
        %v255 = vlaneseq
        %v256 = vshrl.u32 %v255, 7
        %v257 = vsub.s32 0, %v256
        %v258 = vrot.slane %v253, %v257
        %v259 = vlaneseq
        %v260 = vshrl.u32 %v259, 7
        %v261 = vsub.s32 1, %v260
        %v262 = vrot.slane %v253, %v261
        %v265 = vmul.f32 %v251, %v258
        %v266 = vmul.f32 %v250, %v262
        %267 = vrot.lane.b32.xlu0 %v196, 1
        %v268 = vpop.permute.xlu0 %267
        %269 = vrot.lane.b32.xlu0 %v198, 1
        %v270 = vpop.permute.xlu0 %269
        %vm271 = vcmp.lt.s32.totalorder %v205, 1
        %v272 = vsel %vm271, %v268, %v270
        %v273 = vsel %vm271, %v270, %v268
        %s274 = scalar_lea.vmem %s3, 6
        %v275 = vld [vmem:[%s274] sm:$0x3]
        %v277 = vlaneseq
        %v278 = vshrl.u32 %v277, 7
        %v279 = vsub.s32 0, %v278
        %v280 = vrot.slane %v275, %v279
        %v281 = vlaneseq
        %v282 = vshrl.u32 %v281, 7
        %v283 = vsub.s32 1, %v282
        %v284 = vrot.slane %v275, %v283
        %v287 = vmul.f32 %v273, %v280
        %v288 = vmul.f32 %v272, %v284
        %289 = vrot.lane.b32.xlu0 %v196, 127
        %v290 = vpop.permute.xlu0 %289
        %291 = vrot.lane.b32.xlu0 %v198, 127
        %v292 = vpop.permute.xlu0 %291
        %vm293 = vcmp.lt.s32.totalorder %v205, 127
        %v294 = vsel %vm293, %v290, %v292
        %v295 = vsel %vm293, %v292, %v290
        %s296 = scalar_lea.vmem %s3, 10
        %v297 = vld [vmem:[%s296] sm:$0x3]
        %v299 = vlaneseq
        %v300 = vshrl.u32 %v299, 7
        %v301 = vsub.s32 0, %v300
        %v302 = vrot.slane %v297, %v301
        %v303 = vlaneseq
        %v304 = vshrl.u32 %v303, 7
        %v305 = vsub.s32 1, %v304
        %v306 = vrot.slane %v297, %v305
        %v309 = vmul.f32 %v294, %v302
        %v310 = vmul.f32 %v295, %v306
        %311 = vrot.lane.b32.xlu0 %v196, 113
        %v312 = vpop.permute.xlu0 %311
        %313 = vrot.lane.b32.xlu0 %v198, 113
        %v314 = vpop.permute.xlu0 %313
        %vm315 = vcmp.lt.s32.totalorder %v205, 113
        %v316 = vsel %vm315, %v312, %v314
        %v317 = vsel %vm315, %v314, %v312
        %s318 = scalar_lea.vmem %s3, 12
        %v319 = vld [vmem:[%s318] sm:$0x3]
        %v321 = vlaneseq
        %v322 = vshrl.u32 %v321, 7
        %v323 = vsub.s32 0, %v322
        %v324 = vrot.slane %v319, %v323
        %v325 = vlaneseq
        %v326 = vshrl.u32 %v325, 7
        %v327 = vsub.s32 1, %v326
        %v328 = vrot.slane %v319, %v327
        %v331 = vmul.f32 %v316, %v324
        %v332 = vmul.f32 %v317, %v328
        %333 = vrot.lane.b32.xlu0 %v196, 112
        %v334 = vpop.permute.xlu0 %333
        %335 = vrot.lane.b32.xlu0 %v198, 112
        %v336 = vpop.permute.xlu0 %335
        %vm337 = vcmp.lt.s32.totalorder %v205, 112
        %v338 = vsel %vm337, %v334, %v336
        %v339 = vsel %vm337, %v336, %v334
        %s340 = scalar_lea.vmem %s3, 14
        %v341 = vld [vmem:[%s340] sm:$0x3]
        %v343 = vlaneseq
        %v344 = vshrl.u32 %v343, 7
        %v345 = vsub.s32 0, %v344
        %v346 = vrot.slane %v341, %v345
        %v347 = vlaneseq
        %v348 = vshrl.u32 %v347, 7
        %v349 = vsub.s32 1, %v348
        %v350 = vrot.slane %v341, %v349
        %v353 = vmul.f32 %v338, %v346
        %v354 = vmul.f32 %v339, %v350
        %355 = vrot.lane.b32.xlu0 %v196, 111
        %v356 = vpop.permute.xlu0 %355
        %357 = vrot.lane.b32.xlu0 %v198, 111
        %v358 = vpop.permute.xlu0 %357
        %vm359 = vcmp.lt.s32.totalorder %v205, 111
        %v360 = vsel %vm359, %v356, %v358
        %v361 = vsel %vm359, %v358, %v356
        %s362 = scalar_lea.vmem %s3, 16
        %v363 = vld [vmem:[%s362] sm:$0x3]
        %v365 = vlaneseq
        %v366 = vshrl.u32 %v365, 7
        %v367 = vsub.s32 0, %v366
        %v368 = vrot.slane %v363, %v367
        %v369 = vlaneseq
        %v370 = vshrl.u32 %v369, 7
        %v371 = vsub.s32 1, %v370
        %v372 = vrot.slane %v363, %v371
        %v375 = vmul.f32 %v360, %v368
        %v376 = vmul.f32 %v361, %v372
        %v377 = vld [vmem:[%s1] sm:$0xf]
        %379 = vset.pattern.permute.xlu0 0
        %380 = vperm.xlu0 %379, %v377
        %v381 = vpop.permute.xlu0 %380
        %v383 = vmul.f32 %v221, %v381
        %v384 = vmul.f32 %v222, %v381
        %s385 = scalar_lea.vmem %s1, 4
        %v386 = vld [vmem:[%s385] sm:$0xf]
        %388 = vset.pattern.permute.xlu0 0
        %389 = vperm.xlu0 %388, %v386
        %v390 = vpop.permute.xlu0 %389
        %v392 = vmul.f32 %v243, %v390
        %v393 = vmul.f32 %v244, %v390
        %v394 = vadd.f32 %v383, %v392
        %v395 = vadd.f32 %v384, %v393
        %s396 = scalar_lea.vmem %s1, 8
        %v397 = vld [vmem:[%s396] sm:$0xf]
        %399 = vset.pattern.permute.xlu0 0
        %400 = vperm.xlu0 %399, %v397
        %v401 = vpop.permute.xlu0 %400
        %v403 = vmul.f32 %v265, %v401
        %v404 = vmul.f32 %v266, %v401
        %v405 = vadd.f32 %v394, %v403
        %v406 = vadd.f32 %v395, %v404
        %s407 = scalar_lea.vmem %s1, 12
        %v408 = vld [vmem:[%s407] sm:$0xf]
        %410 = vset.pattern.permute.xlu0 0
        %411 = vperm.xlu0 %410, %v408
        %v412 = vpop.permute.xlu0 %411
        %v414 = vmul.f32 %v287, %v412
        %v415 = vmul.f32 %v288, %v412
        %v416 = vadd.f32 %v405, %v414
        %v417 = vadd.f32 %v406, %v415
        %s418 = scalar_lea.vmem %s1, 16
        %v419 = vld [vmem:[%s418] sm:$0xf]
        %421 = vset.pattern.permute.xlu0 0
        %422 = vperm.xlu0 %421, %v419
        %v423 = vpop.permute.xlu0 %422
        %v425 = vunpack.c.l.s4 839922192
        %v426 = vunpack.c.0.s8 %v425
        %v427 = vlaneseq
        %v428 = vshrl.u32 %v427, 7
        %v429 = vsub.s32 %v426, %v428
        %v430 = vrot.slane %v423, %v429
        %v432 = vmul.f32 %v196, %v430
        %v434 = vcombine.high %v432, %v432
        %v436 = vadd.f32 %v416, %v432
        %v437 = vadd.f32 %v417, %v434
        %s438 = scalar_lea.vmem %s1, 20
        %v439 = vld [vmem:[%s438] sm:$0xf]
        %441 = vset.pattern.permute.xlu0 0
        %442 = vperm.xlu0 %441, %v439
        %v443 = vpop.permute.xlu0 %442
        %v445 = vmul.f32 %v309, %v443
        %v446 = vmul.f32 %v310, %v443
        %v447 = vadd.f32 %v436, %v445
        %v448 = vadd.f32 %v437, %v446
        %s449 = scalar_lea.vmem %s1, 24
        %v450 = vld [vmem:[%s449] sm:$0xf]
        %452 = vset.pattern.permute.xlu0 0
        %453 = vperm.xlu0 %452, %v450
        %v454 = vpop.permute.xlu0 %453
        %v456 = vmul.f32 %v331, %v454
        %v457 = vmul.f32 %v332, %v454
        %v458 = vadd.f32 %v447, %v456
        %v459 = vadd.f32 %v448, %v457
        %s460 = scalar_lea.vmem %s1, 28
        %v461 = vld [vmem:[%s460] sm:$0xf]
        %463 = vset.pattern.permute.xlu0 0
        %464 = vperm.xlu0 %463, %v461
        %v465 = vpop.permute.xlu0 %464
        %v467 = vmul.f32 %v353, %v465
        %v468 = vmul.f32 %v354, %v465
        %v469 = vadd.f32 %v458, %v467
        %v470 = vadd.f32 %v459, %v468
        %s471 = scalar_lea.vmem %s1, 32
        %v472 = vld [vmem:[%s471] sm:$0xf]
        %474 = vset.pattern.permute.xlu0 0
        %475 = vperm.xlu0 %474, %v472
        %v476 = vpop.permute.xlu0 %475
        %v478 = vmul.f32 %v375, %v476
        %v479 = vmul.f32 %v376, %v476
        %v480 = vadd.f32 %v469, %v478
        %v481 = vadd.f32 %v470, %v479
        %vm482 = vcmask 1043456
        %v483 = vsel %vm482, %v480, 0.0
        %v484 = vrot.slane %v483, 4
        %v485 = vadd.f32 %v483, %v484
        %v486 = vrot.slane %v485, 2
        %v487 = vadd.f32 %v485, %v486
        %v488 = vrot.slane %v487, 1
        %v489 = vadd.f32 %v487, %v488
        %v490 = vsel %vm482, %v481, 0.0
        %v491 = vrot.slane %v490, 4
        %v492 = vadd.f32 %v490, %v491
        %v493 = vrot.slane %v492, 2
        %v494 = vadd.f32 %v492, %v493
        %v495 = vrot.slane %v494, 1
        %v496 = vadd.f32 %v494, %v495
        %vm497 = vcmask 1040384
        %v498 = vsel %vm497, %v489, 0.0
        %v499 = vsel %vm497, %v496, 0.0
        %v500 = vadd.f32 %v498, %v499
        %501 = vadd.xlane.f32.xlu0 %v500
        %v502 = vpop.xlane.xlu0 %501
        %v503 = vrot.slane %v502, 4
        %v504 = vadd.f32 %v502, %v503
        %v505 = vrot.slane %v504, 2
        %v506 = vadd.f32 %v504, %v505
        %v507 = vrot.slane %v506, 1
        %v508 = vadd.f32 %v506, %v507
        %s509 = vtos %v508
        %v510 = vmul.f32 %v489, %v489
        %v511 = vmul.f32 %v496, %v496
        %v512 = vsel %vm497, %v510, 0.0
        %v513 = vsel %vm497, %v511, 0.0
        %v514 = vadd.f32 %v512, %v513
        %515 = vadd.xlane.f32.xlu0 %v514
        %v516 = vpop.xlane.xlu0 %515
        %v517 = vrot.slane %v516, 4
        %v518 = vadd.f32 %v516, %v517
        %v519 = vrot.slane %v518, 2
        %v520 = vadd.f32 %v518, %v519
        %v521 = vrot.slane %v520, 1
        %v522 = vadd.f32 %v520, %v521
        %s523 = vtos %v522
        %s524 = smul.f32 %s509, 0.00390625
        %s525 = smul.f32 %s523, 0.00390625
        %s526 = smul.f32 %s524, %s524
        %s527 = ssub.f32 %s525, %s526
        %v528 = vstv %s524
        %v529 = vsub.f32 %v489, %v528
        %v530 = vsub.f32 %v496, %v528
        %s531 = sadd.f32 %s527, 1e-05
        %v532 = vstv %s531
        %v533 = vrsqrt.pop %v532
        %s534 = vtos %v533
        %v535 = vstv %s534
        %v536 = vmul.f32 %v529, %v535
        %v537 = vmul.f32 %v530, %v535
        %s538 = scalar_lea.vmem %s1, 36
        %v539 = vld [vmem:[%s538] sm:$0xf]
        %541 = vset.pattern.permute.xlu0 0
        %542 = vperm.xlu0 %541, %v539
        %v543 = vpop.permute.xlu0 %542
        %v545 = vmul.f32 %v221, %v543
        %v546 = vmul.f32 %v222, %v543
        %s547 = scalar_lea.vmem %s1, 40
        %v548 = vld [vmem:[%s547] sm:$0xf]
        %550 = vset.pattern.permute.xlu0 0
        %551 = vperm.xlu0 %550, %v548
        %v552 = vpop.permute.xlu0 %551
        %v554 = vmul.f32 %v243, %v552
        %v555 = vmul.f32 %v244, %v552
        %v556 = vadd.f32 %v545, %v554
        %v557 = vadd.f32 %v546, %v555
        %s558 = scalar_lea.vmem %s1, 44
        %v559 = vld [vmem:[%s558] sm:$0xf]
        %561 = vset.pattern.permute.xlu0 0
        %562 = vperm.xlu0 %561, %v559
        %v563 = vpop.permute.xlu0 %562
        %v565 = vmul.f32 %v265, %v563
        %v566 = vmul.f32 %v266, %v563
        %v567 = vadd.f32 %v556, %v565
        %v568 = vadd.f32 %v557, %v566
        %s569 = scalar_lea.vmem %s1, 48
        %v570 = vld [vmem:[%s569] sm:$0xf]
        %572 = vset.pattern.permute.xlu0 0
        %573 = vperm.xlu0 %572, %v570
        %v574 = vpop.permute.xlu0 %573
        %v576 = vmul.f32 %v287, %v574
        %v577 = vmul.f32 %v288, %v574
        %v578 = vadd.f32 %v567, %v576
        %v579 = vadd.f32 %v568, %v577
        %s580 = scalar_lea.vmem %s1, 52
        %v581 = vld [vmem:[%s580] sm:$0xf]
        %583 = vset.pattern.permute.xlu0 0
        %584 = vperm.xlu0 %583, %v581
        %v585 = vpop.permute.xlu0 %584
        %v587 = vunpack.c.l.s4 839922192
        %v588 = vunpack.c.0.s8 %v587
        %v589 = vlaneseq
        %v590 = vshrl.u32 %v589, 7
        %v591 = vsub.s32 %v588, %v590
        %v592 = vrot.slane %v585, %v591
        %v594 = vmul.f32 %v196, %v592
        %v596 = vcombine.high %v594, %v594
        %v598 = vadd.f32 %v578, %v594
        %v599 = vadd.f32 %v579, %v596
        %s600 = scalar_lea.vmem %s1, 56
        %v601 = vld [vmem:[%s600] sm:$0xf]
        %603 = vset.pattern.permute.xlu0 0
        %604 = vperm.xlu0 %603, %v601
        %v605 = vpop.permute.xlu0 %604
        %v607 = vmul.f32 %v309, %v605
        %v608 = vmul.f32 %v310, %v605
        %v609 = vadd.f32 %v598, %v607
        %v610 = vadd.f32 %v599, %v608
        %s611 = scalar_lea.vmem %s1, 60
        %v612 = vld [vmem:[%s611] sm:$0xf]
        %614 = vset.pattern.permute.xlu0 0
        %615 = vperm.xlu0 %614, %v612
        %v616 = vpop.permute.xlu0 %615
        %v618 = vmul.f32 %v331, %v616
        %v619 = vmul.f32 %v332, %v616
        %v620 = vadd.f32 %v609, %v618
        %v621 = vadd.f32 %v610, %v619
        %s622 = scalar_lea.vmem %s1, 64
        %v623 = vld [vmem:[%s622] sm:$0xf]
        %625 = vset.pattern.permute.xlu0 0
        %626 = vperm.xlu0 %625, %v623
        %v627 = vpop.permute.xlu0 %626
        %v629 = vmul.f32 %v353, %v627
        %v630 = vmul.f32 %v354, %v627
        %v631 = vadd.f32 %v620, %v629
        %v632 = vadd.f32 %v621, %v630
        %s633 = scalar_lea.vmem %s1, 68
        %v634 = vld [vmem:[%s633] sm:$0xf]
        %636 = vset.pattern.permute.xlu0 0
        %637 = vperm.xlu0 %636, %v634
        %v638 = vpop.permute.xlu0 %637
        %v640 = vmul.f32 %v375, %v638
        %v641 = vmul.f32 %v376, %v638
        %v642 = vadd.f32 %v631, %v640
        %v643 = vadd.f32 %v632, %v641
        %v644 = vsel %vm482, %v642, 0.0
        %v645 = vrot.slane %v644, 4
        %v646 = vadd.f32 %v644, %v645
        %v647 = vrot.slane %v646, 2
        %v648 = vadd.f32 %v646, %v647
        %v649 = vrot.slane %v648, 1
        %v650 = vadd.f32 %v648, %v649
        %v651 = vsel %vm482, %v643, 0.0
        %v652 = vrot.slane %v651, 4
        %v653 = vadd.f32 %v651, %v652
        %v654 = vrot.slane %v653, 2
        %v655 = vadd.f32 %v653, %v654
        %v656 = vrot.slane %v655, 1
        %v657 = vadd.f32 %v655, %v656
        %v658 = vsel %vm497, %v650, 0.0
        %v659 = vsel %vm497, %v657, 0.0
        %v660 = vadd.f32 %v658, %v659
        %661 = vadd.xlane.f32.xlu0 %v660
        %v662 = vpop.xlane.xlu0 %661
        %v663 = vrot.slane %v662, 4
        %v664 = vadd.f32 %v662, %v663
        %v665 = vrot.slane %v664, 2
        %v666 = vadd.f32 %v664, %v665
        %v667 = vrot.slane %v666, 1
        %v668 = vadd.f32 %v666, %v667
        %s669 = vtos %v668
        %v670 = vmul.f32 %v650, %v650
        %v671 = vmul.f32 %v657, %v657
        %v672 = vsel %vm497, %v670, 0.0
        %v673 = vsel %vm497, %v671, 0.0
        %v674 = vadd.f32 %v672, %v673
        %675 = vadd.xlane.f32.xlu0 %v674
        %v676 = vpop.xlane.xlu0 %675
        %v677 = vrot.slane %v676, 4
        %v678 = vadd.f32 %v676, %v677
        %v679 = vrot.slane %v678, 2
        %v680 = vadd.f32 %v678, %v679
        %v681 = vrot.slane %v680, 1
        %v682 = vadd.f32 %v680, %v681
        %s683 = vtos %v682
        %s684 = smul.f32 %s669, 0.00390625
        %s685 = smul.f32 %s683, 0.00390625
        %s686 = smul.f32 %s684, %s684
        %s687 = ssub.f32 %s685, %s686
        %v688 = vstv %s684
        %v689 = vsub.f32 %v650, %v688
        %v690 = vsub.f32 %v657, %v688
        %s691 = sadd.f32 %s687, 1e-05
        %v692 = vstv %s691
        %v693 = vrsqrt.pop %v692
        %s694 = vtos %v693
        %v695 = vstv %s694
        %v696 = vmul.f32 %v689, %v695
        %v697 = vmul.f32 %v690, %v695
        %s698 = scalar_lea.vmem %s1, 72
        %v699 = vld [vmem:[%s698] sm:$0xf]
        %701 = vset.pattern.permute.xlu0 0
        %702 = vperm.xlu0 %701, %v699
        %v703 = vpop.permute.xlu0 %702
        %v705 = vmul.f32 %v221, %v703
        %v706 = vmul.f32 %v222, %v703
        %s707 = scalar_lea.vmem %s1, 76
        %v708 = vld [vmem:[%s707] sm:$0xf]
        %710 = vset.pattern.permute.xlu0 0
        %711 = vperm.xlu0 %710, %v708
        %v712 = vpop.permute.xlu0 %711
        %v714 = vmul.f32 %v243, %v712
        %v715 = vmul.f32 %v244, %v712
        %v716 = vadd.f32 %v705, %v714
        %v717 = vadd.f32 %v706, %v715
        %s718 = scalar_lea.vmem %s1, 80
        %v719 = vld [vmem:[%s718] sm:$0xf]
        %721 = vset.pattern.permute.xlu0 0
        %722 = vperm.xlu0 %721, %v719
        %v723 = vpop.permute.xlu0 %722
        %v725 = vmul.f32 %v265, %v723
        %v726 = vmul.f32 %v266, %v723
        %v727 = vadd.f32 %v716, %v725
        %v728 = vadd.f32 %v717, %v726
        %s729 = scalar_lea.vmem %s1, 84
        %v730 = vld [vmem:[%s729] sm:$0xf]
        %732 = vset.pattern.permute.xlu0 0
        %733 = vperm.xlu0 %732, %v730
        %v734 = vpop.permute.xlu0 %733
        %v736 = vmul.f32 %v287, %v734
        %v737 = vmul.f32 %v288, %v734
        %v738 = vadd.f32 %v727, %v736
        %v739 = vadd.f32 %v728, %v737
        %s740 = scalar_lea.vmem %s1, 88
        %v741 = vld [vmem:[%s740] sm:$0xf]
        %743 = vset.pattern.permute.xlu0 0
        %744 = vperm.xlu0 %743, %v741
        %v745 = vpop.permute.xlu0 %744
        %v747 = vunpack.c.l.s4 839922192
        %v748 = vunpack.c.0.s8 %v747
        %v749 = vlaneseq
        %v750 = vshrl.u32 %v749, 7
        %v751 = vsub.s32 %v748, %v750
        %v752 = vrot.slane %v745, %v751
        %v754 = vmul.f32 %v196, %v752
        %v756 = vcombine.high %v754, %v754
        %v758 = vadd.f32 %v738, %v754
        %v759 = vadd.f32 %v739, %v756
        %s760 = scalar_lea.vmem %s1, 92
        %v761 = vld [vmem:[%s760] sm:$0xf]
        %763 = vset.pattern.permute.xlu0 0
        %764 = vperm.xlu0 %763, %v761
        %v765 = vpop.permute.xlu0 %764
        %v767 = vmul.f32 %v309, %v765
        %v768 = vmul.f32 %v310, %v765
        %v769 = vadd.f32 %v758, %v767
        %v770 = vadd.f32 %v759, %v768
        %s771 = scalar_lea.vmem %s1, 96
        %v772 = vld [vmem:[%s771] sm:$0xf]
        %774 = vset.pattern.permute.xlu0 0
        %775 = vperm.xlu0 %774, %v772
        %v776 = vpop.permute.xlu0 %775
        %v778 = vmul.f32 %v331, %v776
        %v779 = vmul.f32 %v332, %v776
        %v780 = vadd.f32 %v769, %v778
        %v781 = vadd.f32 %v770, %v779
        %s782 = scalar_lea.vmem %s1, 100
        %v783 = vld [vmem:[%s782] sm:$0xf]
        %785 = vset.pattern.permute.xlu0 0
        %786 = vperm.xlu0 %785, %v783
        %v787 = vpop.permute.xlu0 %786
        %v789 = vmul.f32 %v353, %v787
        %v790 = vmul.f32 %v354, %v787
        %v791 = vadd.f32 %v780, %v789
        %v792 = vadd.f32 %v781, %v790
        %s793 = scalar_lea.vmem %s1, 104
        %v794 = vld [vmem:[%s793] sm:$0xf]
        %796 = vset.pattern.permute.xlu0 0
        %797 = vperm.xlu0 %796, %v794
        %v798 = vpop.permute.xlu0 %797
        %v800 = vmul.f32 %v375, %v798
        %v801 = vmul.f32 %v376, %v798
        %v802 = vadd.f32 %v791, %v800
        %v803 = vadd.f32 %v792, %v801
        %v804 = vsel %vm482, %v802, 0.0
        %v805 = vrot.slane %v804, 4
        %v806 = vadd.f32 %v804, %v805
        %v807 = vrot.slane %v806, 2
        %v808 = vadd.f32 %v806, %v807
        %v809 = vrot.slane %v808, 1
        %v810 = vadd.f32 %v808, %v809
        %v811 = vsel %vm482, %v803, 0.0
        %v812 = vrot.slane %v811, 4
        %v813 = vadd.f32 %v811, %v812
        %v814 = vrot.slane %v813, 2
        %v815 = vadd.f32 %v813, %v814
        %v816 = vrot.slane %v815, 1
        %v817 = vadd.f32 %v815, %v816
        %v818 = vsel %vm497, %v810, 0.0
        %v819 = vsel %vm497, %v817, 0.0
        %v820 = vadd.f32 %v818, %v819
        %821 = vadd.xlane.f32.xlu0 %v820
        %v822 = vpop.xlane.xlu0 %821
        %v823 = vrot.slane %v822, 4
        %v824 = vadd.f32 %v822, %v823
        %v825 = vrot.slane %v824, 2
        %v826 = vadd.f32 %v824, %v825
        %v827 = vrot.slane %v826, 1
        %v828 = vadd.f32 %v826, %v827
        %s829 = vtos %v828
        %v830 = vmul.f32 %v810, %v810
        %v831 = vmul.f32 %v817, %v817
        %v832 = vsel %vm497, %v830, 0.0
        %v833 = vsel %vm497, %v831, 0.0
        %v834 = vadd.f32 %v832, %v833
        %835 = vadd.xlane.f32.xlu0 %v834
        %v836 = vpop.xlane.xlu0 %835
        %v837 = vrot.slane %v836, 4
        %v838 = vadd.f32 %v836, %v837
        %v839 = vrot.slane %v838, 2
        %v840 = vadd.f32 %v838, %v839
        %v841 = vrot.slane %v840, 1
        %v842 = vadd.f32 %v840, %v841
        %s843 = vtos %v842
        %s844 = smul.f32 %s829, 0.00390625
        %s845 = smul.f32 %s843, 0.00390625
        %s846 = smul.f32 %s844, %s844
        %s847 = ssub.f32 %s845, %s846
        %v848 = vstv %s844
        %v849 = vsub.f32 %v810, %v848
        %v850 = vsub.f32 %v817, %v848
        %s851 = sadd.f32 %s847, 1e-05
        %v852 = vstv %s851
        %v853 = vrsqrt.pop %v852
        %s854 = vtos %v853
        %v855 = vstv %s854
        %v856 = vmul.f32 %v849, %v855
        %v857 = vmul.f32 %v850, %v855
        %s858 = scalar_lea.vmem %s1, 108
        %v859 = vld [vmem:[%s858] sm:$0xf]
        %861 = vset.pattern.permute.xlu0 0
        %862 = vperm.xlu0 %861, %v859
        %v863 = vpop.permute.xlu0 %862
        %v865 = vmul.f32 %v221, %v863
        %v866 = vmul.f32 %v222, %v863
        %s867 = scalar_lea.vmem %s1, 112
        %v868 = vld [vmem:[%s867] sm:$0xf]
        %870 = vset.pattern.permute.xlu0 0
        %871 = vperm.xlu0 %870, %v868
        %v872 = vpop.permute.xlu0 %871
        %v874 = vmul.f32 %v243, %v872
        %v875 = vmul.f32 %v244, %v872
        %v876 = vadd.f32 %v865, %v874
        %v877 = vadd.f32 %v866, %v875
        %s878 = scalar_lea.vmem %s1, 116
        %v879 = vld [vmem:[%s878] sm:$0xf]
        %881 = vset.pattern.permute.xlu0 0
        %882 = vperm.xlu0 %881, %v879
        %v883 = vpop.permute.xlu0 %882
        %v885 = vmul.f32 %v265, %v883
        %v886 = vmul.f32 %v266, %v883
        %v887 = vadd.f32 %v876, %v885
        %v888 = vadd.f32 %v877, %v886
        %s889 = scalar_lea.vmem %s1, 120
        %v890 = vld [vmem:[%s889] sm:$0xf]
        %892 = vset.pattern.permute.xlu0 0
        %893 = vperm.xlu0 %892, %v890
        %v894 = vpop.permute.xlu0 %893
        %v896 = vmul.f32 %v287, %v894
        %v897 = vmul.f32 %v288, %v894
        %v898 = vadd.f32 %v887, %v896
        %v899 = vadd.f32 %v888, %v897
        %s900 = scalar_lea.vmem %s1, 124
        %v901 = vld [vmem:[%s900] sm:$0xf]
        %903 = vset.pattern.permute.xlu0 0
        %904 = vperm.xlu0 %903, %v901
        %v905 = vpop.permute.xlu0 %904
        %v907 = vunpack.c.l.s4 839922192
        %v908 = vunpack.c.0.s8 %v907
        %v909 = vlaneseq
        %v910 = vshrl.u32 %v909, 7
        %v911 = vsub.s32 %v908, %v910
        %v912 = vrot.slane %v905, %v911
        %v914 = vmul.f32 %v196, %v912
        %v916 = vcombine.high %v914, %v914
        %v918 = vadd.f32 %v898, %v914
        %v919 = vadd.f32 %v899, %v916
        %s920 = scalar_lea.vmem %s1, 128
        %v921 = vld [vmem:[%s920] sm:$0xf]
        %923 = vset.pattern.permute.xlu0 0
        %924 = vperm.xlu0 %923, %v921
        %v925 = vpop.permute.xlu0 %924
        %v927 = vmul.f32 %v309, %v925
        %v928 = vmul.f32 %v310, %v925
        %v929 = vadd.f32 %v918, %v927
        %v930 = vadd.f32 %v919, %v928
        %s931 = scalar_lea.vmem %s1, 132
        %v932 = vld [vmem:[%s931] sm:$0xf]
        %934 = vset.pattern.permute.xlu0 0
        %935 = vperm.xlu0 %934, %v932
        %v936 = vpop.permute.xlu0 %935
        %v938 = vmul.f32 %v331, %v936
        %v939 = vmul.f32 %v332, %v936
        %v940 = vadd.f32 %v929, %v938
        %v941 = vadd.f32 %v930, %v939
        %s942 = scalar_lea.vmem %s1, 136
        %v943 = vld [vmem:[%s942] sm:$0xf]
        %945 = vset.pattern.permute.xlu0 0
        %946 = vperm.xlu0 %945, %v943
        %v947 = vpop.permute.xlu0 %946
        %v949 = vmul.f32 %v353, %v947
        %v950 = vmul.f32 %v354, %v947
        %v951 = vadd.f32 %v940, %v949
        %v952 = vadd.f32 %v941, %v950
        %s953 = scalar_lea.vmem %s1, 140
        %v954 = vld [vmem:[%s953] sm:$0xf]
        %956 = vset.pattern.permute.xlu0 0
        %957 = vperm.xlu0 %956, %v954
        %v958 = vpop.permute.xlu0 %957
        %v960 = vmul.f32 %v375, %v958
        %v961 = vmul.f32 %v376, %v958
        %v962 = vadd.f32 %v951, %v960
        %v963 = vadd.f32 %v952, %v961
        %v964 = vsel %vm482, %v962, 0.0
        %v965 = vrot.slane %v964, 4
        %v966 = vadd.f32 %v964, %v965
        %v967 = vrot.slane %v966, 2
        %v968 = vadd.f32 %v966, %v967
        %v969 = vrot.slane %v968, 1
        %v970 = vadd.f32 %v968, %v969
        %v971 = vsel %vm482, %v963, 0.0
        %v972 = vrot.slane %v971, 4
        %v973 = vadd.f32 %v971, %v972
        %v974 = vrot.slane %v973, 2
        %v975 = vadd.f32 %v973, %v974
        %v976 = vrot.slane %v975, 1
        %v977 = vadd.f32 %v975, %v976
        %v978 = vsel %vm497, %v970, 0.0
        %v979 = vsel %vm497, %v977, 0.0
        %v980 = vadd.f32 %v978, %v979
        %981 = vadd.xlane.f32.xlu0 %v980
        %v982 = vpop.xlane.xlu0 %981
        %v983 = vrot.slane %v982, 4
        %v984 = vadd.f32 %v982, %v983
        %v985 = vrot.slane %v984, 2
        %v986 = vadd.f32 %v984, %v985
        %v987 = vrot.slane %v986, 1
        %v988 = vadd.f32 %v986, %v987
        %s989 = vtos %v988
        %v990 = vmul.f32 %v970, %v970
        %v991 = vmul.f32 %v977, %v977
        %v992 = vsel %vm497, %v990, 0.0
        %v993 = vsel %vm497, %v991, 0.0
        %v994 = vadd.f32 %v992, %v993
        %995 = vadd.xlane.f32.xlu0 %v994
        %v996 = vpop.xlane.xlu0 %995
        %v997 = vrot.slane %v996, 4
        %v998 = vadd.f32 %v996, %v997
        %v999 = vrot.slane %v998, 2
        %v1000 = vadd.f32 %v998, %v999
        %v1001 = vrot.slane %v1000, 1
        %v1002 = vadd.f32 %v1000, %v1001
        %s1003 = vtos %v1002
        %s1004 = smul.f32 %s989, 0.00390625
        %s1005 = smul.f32 %s1003, 0.00390625
        %s1006 = smul.f32 %s1004, %s1004
        %s1007 = ssub.f32 %s1005, %s1006
        %v1008 = vstv %s1004
        %v1009 = vsub.f32 %v970, %v1008
        %v1010 = vsub.f32 %v977, %v1008
        %s1011 = sadd.f32 %s1007, 1e-05
        %v1012 = vstv %s1011
        %v1013 = vrsqrt.pop %v1012
        %s1014 = vtos %v1013
        %v1015 = vstv %s1014
        %v1016 = vmul.f32 %v1009, %v1015
        %v1017 = vmul.f32 %v1010, %v1015
        %v1018 = vsel %vm497, %v536, %v696
        %v1019 = vsel %vm497, %v537, %v697
        %vm1020 = vcmask 1041408
        %v1021 = vsel %vm1020, %v1018, %v856
        %v1022 = vsel %vm1020, %v1019, %v857
        %vm1023 = vcmask 1042432
        %v1024 = vsel %vm1023, %v1021, %v1016
        %v1025 = vsel %vm1023, %v1022, %v1017
        %1026 = vrot.lane.b32.xlu0 %v1024, 17
        %v1027 = vpop.permute.xlu0 %1026
        %1028 = vrot.lane.b32.xlu0 %v1025, 17
        %v1029 = vpop.permute.xlu0 %1028
        %v1030 = vsel %vm206, %v1027, %v1029
        %v1031 = vsel %vm206, %v1029, %v1027
        %v1032 = vmul.f32 %v1031, %v214
        %v1033 = vmul.f32 %v1030, %v218
        %1034 = vrot.lane.b32.xlu0 %v1024, 16
        %v1035 = vpop.permute.xlu0 %1034
        %1036 = vrot.lane.b32.xlu0 %v1025, 16
        %v1037 = vpop.permute.xlu0 %1036
        %v1038 = vsel %vm227, %v1035, %v1037
        %v1039 = vsel %vm227, %v1037, %v1035
        %v1040 = vmul.f32 %v1039, %v236
        %v1041 = vmul.f32 %v1038, %v240
        %1042 = vrot.lane.b32.xlu0 %v1024, 15
        %v1043 = vpop.permute.xlu0 %1042
        %1044 = vrot.lane.b32.xlu0 %v1025, 15
        %v1045 = vpop.permute.xlu0 %1044
        %v1046 = vsel %vm249, %v1043, %v1045
        %v1047 = vsel %vm249, %v1045, %v1043
        %v1048 = vmul.f32 %v1047, %v258
        %v1049 = vmul.f32 %v1046, %v262
        %1050 = vrot.lane.b32.xlu0 %v1024, 1
        %v1051 = vpop.permute.xlu0 %1050
        %1052 = vrot.lane.b32.xlu0 %v1025, 1
        %v1053 = vpop.permute.xlu0 %1052
        %v1054 = vsel %vm271, %v1051, %v1053
        %v1055 = vsel %vm271, %v1053, %v1051
        %v1056 = vmul.f32 %v1055, %v280
        %v1057 = vmul.f32 %v1054, %v284
        %1058 = vrot.lane.b32.xlu0 %v1024, 127
        %v1059 = vpop.permute.xlu0 %1058
        %1060 = vrot.lane.b32.xlu0 %v1025, 127
        %v1061 = vpop.permute.xlu0 %1060
        %v1062 = vsel %vm293, %v1059, %v1061
        %v1063 = vsel %vm293, %v1061, %v1059
        %v1064 = vmul.f32 %v1062, %v302
        %v1065 = vmul.f32 %v1063, %v306
        %1066 = vrot.lane.b32.xlu0 %v1024, 113
        %v1067 = vpop.permute.xlu0 %1066
        %1068 = vrot.lane.b32.xlu0 %v1025, 113
        %v1069 = vpop.permute.xlu0 %1068
        %v1070 = vsel %vm315, %v1067, %v1069
        %v1071 = vsel %vm315, %v1069, %v1067
        %v1072 = vmul.f32 %v1070, %v324
        %v1073 = vmul.f32 %v1071, %v328
        %1074 = vrot.lane.b32.xlu0 %v1024, 112
        %v1075 = vpop.permute.xlu0 %1074
        %1076 = vrot.lane.b32.xlu0 %v1025, 112
        %v1077 = vpop.permute.xlu0 %1076
        %v1078 = vsel %vm337, %v1075, %v1077
        %v1079 = vsel %vm337, %v1077, %v1075
        %v1080 = vmul.f32 %v1078, %v346
        %v1081 = vmul.f32 %v1079, %v350
        %1082 = vrot.lane.b32.xlu0 %v1024, 111
        %v1083 = vpop.permute.xlu0 %1082
        %1084 = vrot.lane.b32.xlu0 %v1025, 111
        %v1085 = vpop.permute.xlu0 %1084
        %v1086 = vsel %vm359, %v1083, %v1085
        %v1087 = vsel %vm359, %v1085, %v1083
        %v1088 = vmul.f32 %v1086, %v368
        %v1089 = vmul.f32 %v1087, %v372
        %v1090 = vld [vmem:[%s2] sm:$0xf]
        %1092 = vset.pattern.permute.xlu0 0
        %1093 = vperm.xlu0 %1092, %v1090
        %v1094 = vpop.permute.xlu0 %1093
        %v1096 = vmul.f32 %v1032, %v1094
        %v1097 = vmul.f32 %v1033, %v1094
        %s1098 = scalar_lea.vmem %s2, 4
        %v1099 = vld [vmem:[%s1098] sm:$0xf]
        %1101 = vset.pattern.permute.xlu0 0
        %1102 = vperm.xlu0 %1101, %v1099
        %v1103 = vpop.permute.xlu0 %1102
        %v1105 = vmul.f32 %v1040, %v1103
        %v1106 = vmul.f32 %v1041, %v1103
        %v1107 = vadd.f32 %v1096, %v1105
        %v1108 = vadd.f32 %v1097, %v1106
        %s1109 = scalar_lea.vmem %s2, 8
        %v1110 = vld [vmem:[%s1109] sm:$0xf]
        %1112 = vset.pattern.permute.xlu0 0
        %1113 = vperm.xlu0 %1112, %v1110
        %v1114 = vpop.permute.xlu0 %1113
        %v1116 = vmul.f32 %v1048, %v1114
        %v1117 = vmul.f32 %v1049, %v1114
        %v1118 = vadd.f32 %v1107, %v1116
        %v1119 = vadd.f32 %v1108, %v1117
        %s1120 = scalar_lea.vmem %s2, 12
        %v1121 = vld [vmem:[%s1120] sm:$0xf]
        %1123 = vset.pattern.permute.xlu0 0
        %1124 = vperm.xlu0 %1123, %v1121
        %v1125 = vpop.permute.xlu0 %1124
        %v1127 = vmul.f32 %v1056, %v1125
        %v1128 = vmul.f32 %v1057, %v1125
        %v1129 = vadd.f32 %v1118, %v1127
        %v1130 = vadd.f32 %v1119, %v1128
        %s1131 = scalar_lea.vmem %s2, 16
        %v1132 = vld [vmem:[%s1131] sm:$0xf]
        %1134 = vset.pattern.permute.xlu0 0
        %1135 = vperm.xlu0 %1134, %v1132
        %v1136 = vpop.permute.xlu0 %1135
        %v1138 = vmul.f32 %v1024, %v1136
        %v1139 = vmul.f32 %v1025, %v1136
        %v1140 = vadd.f32 %v1129, %v1138
        %v1141 = vadd.f32 %v1130, %v1139
        %s1142 = scalar_lea.vmem %s2, 20
        %v1143 = vld [vmem:[%s1142] sm:$0xf]
        %1145 = vset.pattern.permute.xlu0 0
        %1146 = vperm.xlu0 %1145, %v1143
        %v1147 = vpop.permute.xlu0 %1146
        %v1149 = vmul.f32 %v1064, %v1147
        %v1150 = vmul.f32 %v1065, %v1147
        %v1151 = vadd.f32 %v1140, %v1149
        %v1152 = vadd.f32 %v1141, %v1150
        %s1153 = scalar_lea.vmem %s2, 24
        %v1154 = vld [vmem:[%s1153] sm:$0xf]
        %1156 = vset.pattern.permute.xlu0 0
        %1157 = vperm.xlu0 %1156, %v1154
        %v1158 = vpop.permute.xlu0 %1157
        %v1160 = vmul.f32 %v1072, %v1158
        %v1161 = vmul.f32 %v1073, %v1158
        %v1162 = vadd.f32 %v1151, %v1160
        %v1163 = vadd.f32 %v1152, %v1161
        %s1164 = scalar_lea.vmem %s2, 28
        %v1165 = vld [vmem:[%s1164] sm:$0xf]
        %1167 = vset.pattern.permute.xlu0 0
        %1168 = vperm.xlu0 %1167, %v1165
        %v1169 = vpop.permute.xlu0 %1168
        %v1171 = vmul.f32 %v1080, %v1169
        %v1172 = vmul.f32 %v1081, %v1169
        %v1173 = vadd.f32 %v1162, %v1171
        %v1174 = vadd.f32 %v1163, %v1172
        %s1175 = scalar_lea.vmem %s2, 32
        %v1176 = vld [vmem:[%s1175] sm:$0xf]
        %1178 = vset.pattern.permute.xlu0 0
        %1179 = vperm.xlu0 %1178, %v1176
        %v1180 = vpop.permute.xlu0 %1179
        %v1182 = vmul.f32 %v1088, %v1180
        %v1183 = vmul.f32 %v1089, %v1180
        %v1184 = vadd.f32 %v1173, %v1182
        %v1185 = vadd.f32 %v1174, %v1183
        %v1186 = vsel %vm482, %v1184, 0.0
        %v1187 = vrot.slane %v1186, 4
        %v1188 = vadd.f32 %v1186, %v1187
        %v1189 = vrot.slane %v1188, 2
        %v1190 = vadd.f32 %v1188, %v1189
        %v1191 = vrot.slane %v1190, 1
        %v1192 = vadd.f32 %v1190, %v1191
        %v1193 = vsel %vm482, %v1185, 0.0
        %v1194 = vrot.slane %v1193, 4
        %v1195 = vadd.f32 %v1193, %v1194
        %v1196 = vrot.slane %v1195, 2
        %v1197 = vadd.f32 %v1195, %v1196
        %v1198 = vrot.slane %v1197, 1
        %v1199 = vadd.f32 %v1197, %v1198
        %v1200 = vsel %vm497, %v1192, 0.0
        %v1201 = vsel %vm497, %v1199, 0.0
        %v1202 = vadd.f32 %v1200, %v1201
        %1203 = vadd.xlane.f32.xlu0 %v1202
        %v1204 = vpop.xlane.xlu0 %1203
        %v1205 = vrot.slane %v1204, 4
        %v1206 = vadd.f32 %v1204, %v1205
        %v1207 = vrot.slane %v1206, 2
        %v1208 = vadd.f32 %v1206, %v1207
        %v1209 = vrot.slane %v1208, 1
        %v1210 = vadd.f32 %v1208, %v1209
        %s1211 = vtos %v1210
        %v1212 = vmul.f32 %v1192, %v1192
        %v1213 = vmul.f32 %v1199, %v1199
        %v1214 = vsel %vm497, %v1212, 0.0
        %v1215 = vsel %vm497, %v1213, 0.0
        %v1216 = vadd.f32 %v1214, %v1215
        %1217 = vadd.xlane.f32.xlu0 %v1216
        %v1218 = vpop.xlane.xlu0 %1217
        %v1219 = vrot.slane %v1218, 4
        %v1220 = vadd.f32 %v1218, %v1219
        %v1221 = vrot.slane %v1220, 2
        %v1222 = vadd.f32 %v1220, %v1221
        %v1223 = vrot.slane %v1222, 1
        %v1224 = vadd.f32 %v1222, %v1223
        %s1225 = vtos %v1224
        %s1226 = smul.f32 %s1211, 0.00390625
        %s1227 = smul.f32 %s1225, 0.00390625
        %s1228 = smul.f32 %s1226, %s1226
        %s1229 = ssub.f32 %s1227, %s1228
        %v1230 = vstv %s1226
        %v1231 = vsub.f32 %v1192, %v1230
        %v1232 = vsub.f32 %v1199, %v1230
        %s1233 = sadd.f32 %s1229, 1e-05
        %v1234 = vstv %s1233
        %v1235 = vrsqrt.pop %v1234
        %s1236 = vtos %v1235
        %v1237 = vstv %s1236
        %v1238 = vmul.f32 %v1231, %v1237
        %v1239 = vmul.f32 %v1232, %v1237
        %s1240 = scalar_lea.vmem %s2, 36
        %v1241 = vld [vmem:[%s1240] sm:$0xf]
        %1243 = vset.pattern.permute.xlu0 0
        %1244 = vperm.xlu0 %1243, %v1241
        %v1245 = vpop.permute.xlu0 %1244
        %v1247 = vmul.f32 %v1032, %v1245
        %v1248 = vmul.f32 %v1033, %v1245
        %s1249 = scalar_lea.vmem %s2, 40
        %v1250 = vld [vmem:[%s1249] sm:$0xf]
        %1252 = vset.pattern.permute.xlu0 0
        %1253 = vperm.xlu0 %1252, %v1250
        %v1254 = vpop.permute.xlu0 %1253
        %v1256 = vmul.f32 %v1040, %v1254
        %v1257 = vmul.f32 %v1041, %v1254
        %v1258 = vadd.f32 %v1247, %v1256
        %v1259 = vadd.f32 %v1248, %v1257
        %s1260 = scalar_lea.vmem %s2, 44
        %v1261 = vld [vmem:[%s1260] sm:$0xf]
        %1263 = vset.pattern.permute.xlu0 0
        %1264 = vperm.xlu0 %1263, %v1261
        %v1265 = vpop.permute.xlu0 %1264
        %v1267 = vmul.f32 %v1048, %v1265
        %v1268 = vmul.f32 %v1049, %v1265
        %v1269 = vadd.f32 %v1258, %v1267
        %v1270 = vadd.f32 %v1259, %v1268
        %s1271 = scalar_lea.vmem %s2, 48
        %v1272 = vld [vmem:[%s1271] sm:$0xf]
        %1274 = vset.pattern.permute.xlu0 0
        %1275 = vperm.xlu0 %1274, %v1272
        %v1276 = vpop.permute.xlu0 %1275
        %v1278 = vmul.f32 %v1056, %v1276
        %v1279 = vmul.f32 %v1057, %v1276
        %v1280 = vadd.f32 %v1269, %v1278
        %v1281 = vadd.f32 %v1270, %v1279
        %s1282 = scalar_lea.vmem %s2, 52
        %v1283 = vld [vmem:[%s1282] sm:$0xf]
        %1285 = vset.pattern.permute.xlu0 0
        %1286 = vperm.xlu0 %1285, %v1283
        %v1287 = vpop.permute.xlu0 %1286
        %v1289 = vmul.f32 %v1024, %v1287
        %v1290 = vmul.f32 %v1025, %v1287
        %v1291 = vadd.f32 %v1280, %v1289
        %v1292 = vadd.f32 %v1281, %v1290
        %s1293 = scalar_lea.vmem %s2, 56
        %v1294 = vld [vmem:[%s1293] sm:$0xf]
        %1296 = vset.pattern.permute.xlu0 0
        %1297 = vperm.xlu0 %1296, %v1294
        %v1298 = vpop.permute.xlu0 %1297
        %v1300 = vmul.f32 %v1064, %v1298
        %v1301 = vmul.f32 %v1065, %v1298
        %v1302 = vadd.f32 %v1291, %v1300
        %v1303 = vadd.f32 %v1292, %v1301
        %s1304 = scalar_lea.vmem %s2, 60
        %v1305 = vld [vmem:[%s1304] sm:$0xf]
        %1307 = vset.pattern.permute.xlu0 0
        %1308 = vperm.xlu0 %1307, %v1305
        %v1309 = vpop.permute.xlu0 %1308
        %v1311 = vmul.f32 %v1072, %v1309
        %v1312 = vmul.f32 %v1073, %v1309
        %v1313 = vadd.f32 %v1302, %v1311
        %v1314 = vadd.f32 %v1303, %v1312
        %s1315 = scalar_lea.vmem %s2, 64
        %v1316 = vld [vmem:[%s1315] sm:$0xf]
        %1318 = vset.pattern.permute.xlu0 0
        %1319 = vperm.xlu0 %1318, %v1316
        %v1320 = vpop.permute.xlu0 %1319
        %v1322 = vmul.f32 %v1080, %v1320
        %v1323 = vmul.f32 %v1081, %v1320
        %v1324 = vadd.f32 %v1313, %v1322
        %v1325 = vadd.f32 %v1314, %v1323
        %s1326 = scalar_lea.vmem %s2, 68
        %v1327 = vld [vmem:[%s1326] sm:$0xf]
        %1329 = vset.pattern.permute.xlu0 0
        %1330 = vperm.xlu0 %1329, %v1327
        %v1331 = vpop.permute.xlu0 %1330
        %v1333 = vmul.f32 %v1088, %v1331
        %v1334 = vmul.f32 %v1089, %v1331
        %v1335 = vadd.f32 %v1324, %v1333
        %v1336 = vadd.f32 %v1325, %v1334
        %v1337 = vsel %vm482, %v1335, 0.0
        %v1338 = vrot.slane %v1337, 4
        %v1339 = vadd.f32 %v1337, %v1338
        %v1340 = vrot.slane %v1339, 2
        %v1341 = vadd.f32 %v1339, %v1340
        %v1342 = vrot.slane %v1341, 1
        %v1343 = vadd.f32 %v1341, %v1342
        %v1344 = vsel %vm482, %v1336, 0.0
        %v1345 = vrot.slane %v1344, 4
        %v1346 = vadd.f32 %v1344, %v1345
        %v1347 = vrot.slane %v1346, 2
        %v1348 = vadd.f32 %v1346, %v1347
        %v1349 = vrot.slane %v1348, 1
        %v1350 = vadd.f32 %v1348, %v1349
        %v1351 = vsel %vm497, %v1343, 0.0
        %v1352 = vsel %vm497, %v1350, 0.0
        %v1353 = vadd.f32 %v1351, %v1352
        %1354 = vadd.xlane.f32.xlu0 %v1353
        %v1355 = vpop.xlane.xlu0 %1354
        %v1356 = vrot.slane %v1355, 4
        %v1357 = vadd.f32 %v1355, %v1356
        %v1358 = vrot.slane %v1357, 2
        %v1359 = vadd.f32 %v1357, %v1358
        %v1360 = vrot.slane %v1359, 1
        %v1361 = vadd.f32 %v1359, %v1360
        %s1362 = vtos %v1361
        %v1363 = vmul.f32 %v1343, %v1343
        %v1364 = vmul.f32 %v1350, %v1350
        %v1365 = vsel %vm497, %v1363, 0.0
        %v1366 = vsel %vm497, %v1364, 0.0
        %v1367 = vadd.f32 %v1365, %v1366
        %1368 = vadd.xlane.f32.xlu0 %v1367
        %v1369 = vpop.xlane.xlu0 %1368
        %v1370 = vrot.slane %v1369, 4
        %v1371 = vadd.f32 %v1369, %v1370
        %v1372 = vrot.slane %v1371, 2
        %v1373 = vadd.f32 %v1371, %v1372
        %v1374 = vrot.slane %v1373, 1
        %v1375 = vadd.f32 %v1373, %v1374
        %s1376 = vtos %v1375
        %s1377 = smul.f32 %s1362, 0.00390625
        %s1378 = smul.f32 %s1376, 0.00390625
        %s1379 = smul.f32 %s1377, %s1377
        %s1380 = ssub.f32 %s1378, %s1379
        %v1381 = vstv %s1377
        %v1382 = vsub.f32 %v1343, %v1381
        %v1383 = vsub.f32 %v1350, %v1381
        %s1384 = sadd.f32 %s1380, 1e-05
        %v1385 = vstv %s1384
        %v1386 = vrsqrt.pop %v1385
        %s1387 = vtos %v1386
        %v1388 = vstv %s1387
        %v1389 = vmul.f32 %v1382, %v1388
        %v1390 = vmul.f32 %v1383, %v1388
        %s1391 = scalar_lea.vmem %s2, 72
        %v1392 = vld [vmem:[%s1391] sm:$0xf]
        %1394 = vset.pattern.permute.xlu0 0
        %1395 = vperm.xlu0 %1394, %v1392
        %v1396 = vpop.permute.xlu0 %1395
        %v1398 = vmul.f32 %v1032, %v1396
        %v1399 = vmul.f32 %v1033, %v1396
        %s1400 = scalar_lea.vmem %s2, 76
        %v1401 = vld [vmem:[%s1400] sm:$0xf]
        %1403 = vset.pattern.permute.xlu0 0
        %1404 = vperm.xlu0 %1403, %v1401
        %v1405 = vpop.permute.xlu0 %1404
        %v1407 = vmul.f32 %v1040, %v1405
        %v1408 = vmul.f32 %v1041, %v1405
        %v1409 = vadd.f32 %v1398, %v1407
        %v1410 = vadd.f32 %v1399, %v1408
        %s1411 = scalar_lea.vmem %s2, 80
        %v1412 = vld [vmem:[%s1411] sm:$0xf]
        %1414 = vset.pattern.permute.xlu0 0
        %1415 = vperm.xlu0 %1414, %v1412
        %v1416 = vpop.permute.xlu0 %1415
        %v1418 = vmul.f32 %v1048, %v1416
        %v1419 = vmul.f32 %v1049, %v1416
        %v1420 = vadd.f32 %v1409, %v1418
        %v1421 = vadd.f32 %v1410, %v1419
        %s1422 = scalar_lea.vmem %s2, 84
        %v1423 = vld [vmem:[%s1422] sm:$0xf]
        %1425 = vset.pattern.permute.xlu0 0
        %1426 = vperm.xlu0 %1425, %v1423
        %v1427 = vpop.permute.xlu0 %1426
        %v1429 = vmul.f32 %v1056, %v1427
        %v1430 = vmul.f32 %v1057, %v1427
        %v1431 = vadd.f32 %v1420, %v1429
        %v1432 = vadd.f32 %v1421, %v1430
        %s1433 = scalar_lea.vmem %s2, 88
        %v1434 = vld [vmem:[%s1433] sm:$0xf]
        %1436 = vset.pattern.permute.xlu0 0
        %1437 = vperm.xlu0 %1436, %v1434
        %v1438 = vpop.permute.xlu0 %1437
        %v1440 = vmul.f32 %v1024, %v1438
        %v1441 = vmul.f32 %v1025, %v1438
        %v1442 = vadd.f32 %v1431, %v1440
        %v1443 = vadd.f32 %v1432, %v1441
        %s1444 = scalar_lea.vmem %s2, 92
        %v1445 = vld [vmem:[%s1444] sm:$0xf]
        %1447 = vset.pattern.permute.xlu0 0
        %1448 = vperm.xlu0 %1447, %v1445
        %v1449 = vpop.permute.xlu0 %1448
        %v1451 = vmul.f32 %v1064, %v1449
        %v1452 = vmul.f32 %v1065, %v1449
        %v1453 = vadd.f32 %v1442, %v1451
        %v1454 = vadd.f32 %v1443, %v1452
        %s1455 = scalar_lea.vmem %s2, 96
        %v1456 = vld [vmem:[%s1455] sm:$0xf]
        %1458 = vset.pattern.permute.xlu0 0
        %1459 = vperm.xlu0 %1458, %v1456
        %v1460 = vpop.permute.xlu0 %1459
        %v1462 = vmul.f32 %v1072, %v1460
        %v1463 = vmul.f32 %v1073, %v1460
        %v1464 = vadd.f32 %v1453, %v1462
        %v1465 = vadd.f32 %v1454, %v1463
        %s1466 = scalar_lea.vmem %s2, 100
        %v1467 = vld [vmem:[%s1466] sm:$0xf]
        %1469 = vset.pattern.permute.xlu0 0
        %1470 = vperm.xlu0 %1469, %v1467
        %v1471 = vpop.permute.xlu0 %1470
        %v1473 = vmul.f32 %v1080, %v1471
        %v1474 = vmul.f32 %v1081, %v1471
        %v1475 = vadd.f32 %v1464, %v1473
        %v1476 = vadd.f32 %v1465, %v1474
        %s1477 = scalar_lea.vmem %s2, 104
        %v1478 = vld [vmem:[%s1477] sm:$0xf]
        %1480 = vset.pattern.permute.xlu0 0
        %1481 = vperm.xlu0 %1480, %v1478
        %v1482 = vpop.permute.xlu0 %1481
        %v1484 = vmul.f32 %v1088, %v1482
        %v1485 = vmul.f32 %v1089, %v1482
        %v1486 = vadd.f32 %v1475, %v1484
        %v1487 = vadd.f32 %v1476, %v1485
        %v1488 = vsel %vm482, %v1486, 0.0
        %v1489 = vrot.slane %v1488, 4
        %v1490 = vadd.f32 %v1488, %v1489
        %v1491 = vrot.slane %v1490, 2
        %v1492 = vadd.f32 %v1490, %v1491
        %v1493 = vrot.slane %v1492, 1
        %v1494 = vadd.f32 %v1492, %v1493
        %v1495 = vsel %vm482, %v1487, 0.0
        %v1496 = vrot.slane %v1495, 4
        %v1497 = vadd.f32 %v1495, %v1496
        %v1498 = vrot.slane %v1497, 2
        %v1499 = vadd.f32 %v1497, %v1498
        %v1500 = vrot.slane %v1499, 1
        %v1501 = vadd.f32 %v1499, %v1500
        %v1502 = vsel %vm497, %v1494, 0.0
        %v1503 = vsel %vm497, %v1501, 0.0
        %v1504 = vadd.f32 %v1502, %v1503
        %1505 = vadd.xlane.f32.xlu0 %v1504
        %v1506 = vpop.xlane.xlu0 %1505
        %v1507 = vrot.slane %v1506, 4
        %v1508 = vadd.f32 %v1506, %v1507
        %v1509 = vrot.slane %v1508, 2
        %v1510 = vadd.f32 %v1508, %v1509
        %v1511 = vrot.slane %v1510, 1
        %v1512 = vadd.f32 %v1510, %v1511
        %s1513 = vtos %v1512
        %v1514 = vmul.f32 %v1494, %v1494
        %v1515 = vmul.f32 %v1501, %v1501
        %v1516 = vsel %vm497, %v1514, 0.0
        %v1517 = vsel %vm497, %v1515, 0.0
        %v1518 = vadd.f32 %v1516, %v1517
        %1519 = vadd.xlane.f32.xlu0 %v1518
        %v1520 = vpop.xlane.xlu0 %1519
        %v1521 = vrot.slane %v1520, 4
        %v1522 = vadd.f32 %v1520, %v1521
        %v1523 = vrot.slane %v1522, 2
        %v1524 = vadd.f32 %v1522, %v1523
        %v1525 = vrot.slane %v1524, 1
        %v1526 = vadd.f32 %v1524, %v1525
        %s1527 = vtos %v1526
        %s1528 = smul.f32 %s1513, 0.00390625
        %s1529 = smul.f32 %s1527, 0.00390625
        %s1530 = smul.f32 %s1528, %s1528
        %s1531 = ssub.f32 %s1529, %s1530
        %v1532 = vstv %s1528
        %v1533 = vsub.f32 %v1494, %v1532
        %v1534 = vsub.f32 %v1501, %v1532
        %s1535 = sadd.f32 %s1531, 1e-05
        %v1536 = vstv %s1535
        %v1537 = vrsqrt.pop %v1536
        %s1538 = vtos %v1537
        %v1539 = vstv %s1538
        %v1540 = vmul.f32 %v1533, %v1539
        %v1541 = vmul.f32 %v1534, %v1539
        %s1542 = scalar_lea.vmem %s2, 108
        %v1543 = vld [vmem:[%s1542] sm:$0xf]
        %1545 = vset.pattern.permute.xlu0 0
        %1546 = vperm.xlu0 %1545, %v1543
        %v1547 = vpop.permute.xlu0 %1546
        %v1549 = vmul.f32 %v1032, %v1547
        %v1550 = vmul.f32 %v1033, %v1547
        %s1551 = scalar_lea.vmem %s2, 112
        %v1552 = vld [vmem:[%s1551] sm:$0xf]
        %1554 = vset.pattern.permute.xlu0 0
        %1555 = vperm.xlu0 %1554, %v1552
        %v1556 = vpop.permute.xlu0 %1555
        %v1558 = vmul.f32 %v1040, %v1556
        %v1559 = vmul.f32 %v1041, %v1556
        %v1560 = vadd.f32 %v1549, %v1558
        %v1561 = vadd.f32 %v1550, %v1559
        %s1562 = scalar_lea.vmem %s2, 116
        %v1563 = vld [vmem:[%s1562] sm:$0xf]
        %1565 = vset.pattern.permute.xlu0 0
        %1566 = vperm.xlu0 %1565, %v1563
        %v1567 = vpop.permute.xlu0 %1566
        %v1569 = vmul.f32 %v1048, %v1567
        %v1570 = vmul.f32 %v1049, %v1567
        %v1571 = vadd.f32 %v1560, %v1569
        %v1572 = vadd.f32 %v1561, %v1570
        %s1573 = scalar_lea.vmem %s2, 120
        %v1574 = vld [vmem:[%s1573] sm:$0xf]
        %1576 = vset.pattern.permute.xlu0 0
        %1577 = vperm.xlu0 %1576, %v1574
        %v1578 = vpop.permute.xlu0 %1577
        %v1580 = vmul.f32 %v1056, %v1578
        %v1581 = vmul.f32 %v1057, %v1578
        %v1582 = vadd.f32 %v1571, %v1580
        %v1583 = vadd.f32 %v1572, %v1581
        %s1584 = scalar_lea.vmem %s2, 124
        %v1585 = vld [vmem:[%s1584] sm:$0xf]
        %1587 = vset.pattern.permute.xlu0 0
        %1588 = vperm.xlu0 %1587, %v1585
        %v1589 = vpop.permute.xlu0 %1588
        %v1591 = vmul.f32 %v1024, %v1589
        %v1592 = vmul.f32 %v1025, %v1589
        %v1593 = vadd.f32 %v1582, %v1591
        %v1594 = vadd.f32 %v1583, %v1592
        %s1595 = scalar_lea.vmem %s2, 128
        %v1596 = vld [vmem:[%s1595] sm:$0xf]
        %1598 = vset.pattern.permute.xlu0 0
        %1599 = vperm.xlu0 %1598, %v1596
        %v1600 = vpop.permute.xlu0 %1599
        %v1602 = vmul.f32 %v1064, %v1600
        %v1603 = vmul.f32 %v1065, %v1600
        %v1604 = vadd.f32 %v1593, %v1602
        %v1605 = vadd.f32 %v1594, %v1603
        %s1606 = scalar_lea.vmem %s2, 132
        %v1607 = vld [vmem:[%s1606] sm:$0xf]
        %1609 = vset.pattern.permute.xlu0 0
        %1610 = vperm.xlu0 %1609, %v1607
        %v1611 = vpop.permute.xlu0 %1610
        %v1613 = vmul.f32 %v1072, %v1611
        %v1614 = vmul.f32 %v1073, %v1611
        %v1615 = vadd.f32 %v1604, %v1613
        %v1616 = vadd.f32 %v1605, %v1614
        %s1617 = scalar_lea.vmem %s2, 136
        %v1618 = vld [vmem:[%s1617] sm:$0xf]
        %1620 = vset.pattern.permute.xlu0 0
        %1621 = vperm.xlu0 %1620, %v1618
        %v1622 = vpop.permute.xlu0 %1621
        %v1624 = vmul.f32 %v1080, %v1622
        %v1625 = vmul.f32 %v1081, %v1622
        %v1626 = vadd.f32 %v1615, %v1624
        %v1627 = vadd.f32 %v1616, %v1625
        %s1628 = scalar_lea.vmem %s2, 140
        %v1629 = vld [vmem:[%s1628] sm:$0xf]
        %1631 = vset.pattern.permute.xlu0 0
        %1632 = vperm.xlu0 %1631, %v1629
        %v1633 = vpop.permute.xlu0 %1632
        %v1635 = vmul.f32 %v1088, %v1633
        %v1636 = vmul.f32 %v1089, %v1633
        %v1637 = vadd.f32 %v1626, %v1635
        %v1638 = vadd.f32 %v1627, %v1636
        %v1639 = vsel %vm482, %v1637, 0.0
        %v1640 = vrot.slane %v1639, 4
        %v1641 = vadd.f32 %v1639, %v1640
        %v1642 = vrot.slane %v1641, 2
        %v1643 = vadd.f32 %v1641, %v1642
        %v1644 = vrot.slane %v1643, 1
        %v1645 = vadd.f32 %v1643, %v1644
        %v1646 = vsel %vm482, %v1638, 0.0
        %v1647 = vrot.slane %v1646, 4
        %v1648 = vadd.f32 %v1646, %v1647
        %v1649 = vrot.slane %v1648, 2
        %v1650 = vadd.f32 %v1648, %v1649
        %v1651 = vrot.slane %v1650, 1
        %v1652 = vadd.f32 %v1650, %v1651
        %v1653 = vsel %vm497, %v1645, 0.0
        %v1654 = vsel %vm497, %v1652, 0.0
        %v1655 = vadd.f32 %v1653, %v1654
        %1656 = vadd.xlane.f32.xlu0 %v1655
        %v1657 = vpop.xlane.xlu0 %1656
        %v1658 = vrot.slane %v1657, 4
        %v1659 = vadd.f32 %v1657, %v1658
        %v1660 = vrot.slane %v1659, 2
        %v1661 = vadd.f32 %v1659, %v1660
        %v1662 = vrot.slane %v1661, 1
        %v1663 = vadd.f32 %v1661, %v1662
        %s1664 = vtos %v1663
        %v1665 = vmul.f32 %v1645, %v1645
        %v1666 = vmul.f32 %v1652, %v1652
        %v1667 = vsel %vm497, %v1665, 0.0
        %v1668 = vsel %vm497, %v1666, 0.0
        %v1669 = vadd.f32 %v1667, %v1668
        %1670 = vadd.xlane.f32.xlu0 %v1669
        %v1671 = vpop.xlane.xlu0 %1670
        %v1672 = vrot.slane %v1671, 4
        %v1673 = vadd.f32 %v1671, %v1672
        %v1674 = vrot.slane %v1673, 2
        %v1675 = vadd.f32 %v1673, %v1674
        %v1676 = vrot.slane %v1675, 1
        %v1677 = vadd.f32 %v1675, %v1676
        %s1678 = vtos %v1677
        %s1679 = smul.f32 %s1664, 0.00390625
        %s1680 = smul.f32 %s1678, 0.00390625
        %s1681 = smul.f32 %s1679, %s1679
        %s1682 = ssub.f32 %s1680, %s1681
        %v1683 = vstv %s1679
        %v1684 = vsub.f32 %v1645, %v1683
        %v1685 = vsub.f32 %v1652, %v1683
        %s1686 = sadd.f32 %s1682, 1e-05
        %v1687 = vstv %s1686
        %v1688 = vrsqrt.pop %v1687
        %s1689 = vtos %v1688
        %v1690 = vstv %s1689
        %v1691 = vmul.f32 %v1684, %v1690
        %v1692 = vmul.f32 %v1685, %v1690
        %v1693 = vsel %vm497, %v1238, %v1389
        %v1694 = vsel %vm497, %v1239, %v1390
        %v1695 = vsel %vm1020, %v1693, %v1540
        %v1696 = vsel %vm1020, %v1694, %v1541
        %v1697 = vsel %vm1023, %v1695, %v1691
        %v1698 = vsel %vm1023, %v1696, %v1692
        %v1699 = vadd.f32 %v1697, %v196
        %v1700 = vadd.f32 %v1698, %v198
        %v1703 = vcombine.low %v1699, %v1700
        %1705 = vst [vmem:[%s190] sm:$0xff] %v1703
        %s1706 = sand.u32 %s115, 1
        %s1707 = scalar_lea.sflag [#allocation3], %s1706
        %s1708 = sand.u32 %s115, 1
        %s1709 = smul.addr %s1708, 8
        %s1710 = scalar_lea.vmem [#allocation2], %s1709
        // Predicated region
        $region37: #{tpu_custom_call.1} parent=35 // pred_check
          %p1711 = pneg %p125
        $region38: #{tpu_custom_call.1} parent=35 // pred_check_branch
          %1713 = sbr.rel (%p1711) target = $region40
        $region39: #{tpu_custom_call.1} parent=35 // pred_region
          %s1715 = ssub.s32 128, 128
          %1716 = vsyncadd %s1707, %s1715
          %s1717 = smul.addr %s18, 2
          %s1718 = smul.addr %s1717, 64
          %s1719 = scalar_lea.hbm %s4, %s1718
          %s1721 = sshll.u32 %s1710, 4
          %s1722 = int_to_ptr.vmem [resolvable:$true] %s1721
          %1724 = dma.vmem_to_hbm [thread:$0]  %s1722, 128, %s1719, %s1707
        $region40: #{tpu_custom_call.1} parent=35 // pred_fallthru
          _
      $region36: #{tpu_custom_call.1} parent=5 // pred_fallthru
        _
      %p1725 = scmp.le.s32.totalorder 2, %s13
      // Predicated region
      $region41: #{tpu_custom_call.1} parent=5 // pred_check
        %p1726 = pneg %p1725
      $region42: #{tpu_custom_call.1} parent=5 // pred_check_branch
        %1728 = sbr.rel (%p1726) target = $region44
      $region43: #{tpu_custom_call.1} parent=5 // pred_region
        %s1729 = ssub.s32 %s13, 2
        // Predicated region
        $region45: #{tpu_custom_call.1} parent=43 // pred_check
          %p1730 = pneg %p131
        $region46: #{tpu_custom_call.1} parent=43 // pred_check_branch
          %1732 = sbr.rel (%p1730) target = $region48
        $region47: #{tpu_custom_call.1} parent=43 // pred_region
          %s1733 = sand.u32 %s116, 1
          %s1734 = scalar_lea.sflag [#allocation3], %s1733
          %s1735 = sand.u32 %s116, 1
          %s1736 = smul.addr %s1735, 8
          %s1737 = scalar_lea.vmem [#allocation2], %s1736
          %1738 = dma.done %s1734, 128
        $region48: #{tpu_custom_call.1} parent=43 // pred_fallthru
          _
      $region44: #{tpu_custom_call.1} parent=5 // pred_fallthru
        _
    $region6: #{tpu_custom_call.1} parent=1 // loop_footer
      %s17 = sadd.s32 1, %s13
    $region7: #{tpu_custom_call.1} parent=1 // loop_footer_branch
      %12 = sbr.rel target = $region3
    $region8: #{tpu_custom_call.1} parent=1 // loop_exit
      _
    %1739 = vsyncpa [#allocation3], 1
    %s1740 = scalar_lea.sflag [#allocation3], 1
    %1741 = vsyncpa %s1740, 1

</llo_original>
